<compile_context>
chip_gen: v5e
topology: v5e:2x2
jax: 0.10.0
libtpu: 0.0.40
codegen_flags: <defaults>
</compile_context>

<pallas_src>
import jax
import jax.numpy as jnp
import numpy as np
from jax.experimental import pallas as pl
from jax.experimental.pallas import tpu as pltpu  # noqa: F401  (TPU backend)

INPUT_DIM = 16
HIDDEN_DIM = 32
OUTPUT_DIM = 10
N_LAYERS = 2
BATCH = 2
SEQ = 8


# ----------------------------- Pallas kernel -------------------------------

def _grunet_fused_kernel(x_ref, h0_ref,
                         wih0_ref, whh0_ref, bx0_ref, bhn0_ref,
                         wih1_ref, whh1_ref, bx1_ref, bhn1_ref,
                         fcw_ref, fcb_ref,
                         out_ref, hn_ref):
    """Fused 2-layer GRU + ReLU + FC.

    x_ref   : (T*B, I)   time-major flattened input
    h0_ref  : (L, B, H)  initial hidden states
    wihX    : (in, 3H)   fused input weights  (gate order r, z, n)
    whhX    : (H, 3H)    fused hidden weights
    bxX     : (1, 3H)    pre-summed bias folded into the X projection
    bhnX    : (1, H)     hidden bias of the n-gate (scaled by r -> separate)
    fcw/fcb : (H, O) / (1, O)
    out_ref : (T*B, O)   time-major flattened output
    hn_ref  : (L, B, H)  final hidden states
    """
    H = HIDDEN_DIM
    B = BATCH
    T = SEQ

    def run_layer(xp, whh, bhn, h):
        # xp: (T*B, 3H) hoisted input projection (biases already folded in).
        # Only the small (B, H) x (H, 3H) recurrent matmul stays serial.
        # T is static and tiny -> fully unrolled, all indices static.
        outs = []
        for t in range(T):
            g_x = xp[t * B:(t + 1) * B, :]                               # (B, 3H)
            g_h = jnp.dot(h, whh, preferred_element_type=jnp.float32)    # (B, 3H)
            r = jax.nn.sigmoid(g_x[:, 0:H] + g_h[:, 0:H])
            z = jax.nn.sigmoid(g_x[:, H:2 * H] + g_h[:, H:2 * H])
            n = jnp.tanh(g_x[:, 2 * H:3 * H] + r * (g_h[:, 2 * H:3 * H] + bhn))
            h = (1.0 - z) * n + z * h
            outs.append(h)
        return jnp.concatenate(outs, axis=0), h                          # (T*B, H)

    x = x_ref[...]                                                       # (T*B, I)
    h0 = h0_ref[...]                                                     # (L, B, H)

    # ---- layer 0: hoisted input projection, then serial recurrence ----
    xp0 = (jnp.dot(x, wih0_ref[...], preferred_element_type=jnp.float32)
           + bx0_ref[...])
    l0, h0_final = run_layer(xp0, whh0_ref[...], bhn0_ref[...], h0[0])

    # ---- layer 1 ----
    xp1 = (jnp.dot(l0, wih1_ref[...], preferred_element_type=jnp.float32)
           + bx1_ref[...])
    l1, h1_final = run_layer(xp1, whh1_ref[...], bhn1_ref[...], h0[1])

    hn_ref[0] = h0_final
    hn_ref[1] = h1_final

    # ---- fused ReLU + FC over the whole (T*B, H) slab ----
    act = jnp.maximum(l1, 0.0)
    out_ref[...] = (jnp.dot(act, fcw_ref[...],
                            preferred_element_type=jnp.float32)
                    + fcb_ref[...])


# ------------------------------- wrappers ----------------------------------

def _fuse_layer_params(w_ih, w_hh, b_ih, b_hh):
    """torch-style (3,in,H)/(3,H,H)/(3,1,H) params -> fused kernel layout."""
    wih = jnp.concatenate([w_ih[0], w_ih[1], w_ih[2]], axis=1)    # (in, 3H)
    whh = jnp.concatenate([w_hh[0], w_hh[1], w_hh[2]], axis=1)    # (H, 3H)
    # Pre-sum biases: r/z gates take (b_ih + b_hh); the n-gate input bias is
    # folded into the hoisted X projection; b_hn stays separate (scaled by r).
    bx = jnp.concatenate([b_ih[0] + b_hh[0], b_ih[1] + b_hh[1], b_ih[2]],
                         axis=1)                                  # (1, 3H)
    bhn = b_hh[2]                                                 # (1, H)
    return wih, whh, bx, bhn


def gru_net_forward(x_btf, h, params):
    """Pallas forward.  x_btf: (B, T, I) batch_first, h: (n_layers, B, H)."""
    B, T, I = x_btf.shape
    x_tm = jnp.swapaxes(x_btf, 0, 1).reshape(T * B, I)            # time-major flat

    wih0, whh0, bx0, bhn0 = _fuse_layer_params(*params["gru"][0])
    wih1, whh1, bx1, bhn1 = _fuse_layer_params(*params["gru"][1])

    out_flat, h_n = pl.pallas_call(
        _grunet_fused_kernel,
        out_shape=(
            jax.ShapeDtypeStruct((T * B, OUTPUT_DIM), jnp.float32),
            jax.ShapeDtypeStruct((N_LAYERS, B, HIDDEN_DIM), jnp.float32),
        ),
    )(x_tm, h, wih0, whh0, bx0, bhn0, wih1, whh1, bx1, bhn1,
      params["fc_w"], params["fc_b"])

    out = jnp.swapaxes(out_flat.reshape(T, B, OUTPUT_DIM), 0, 1)  # (B, T, O)
    return out, h_n


# ------------------------- pure-JAX reference ------------------------------

def gru_net_reference(x_btf, h, params):
    B, T, _ = x_btf.shape
    layer_in = x_btf
    h_finals = []
    for l in range(N_LAYERS):
        w_ih, w_hh, b_ih, b_hh = params["gru"][l]

        def step(h_prev, x_t, w_ih=w_ih, w_hh=w_hh, b_ih=b_ih, b_hh=b_hh):
            i_r = x_t @ w_ih[0] + b_ih[0]
            i_z = x_t @ w_ih[1] + b_ih[1]
            i_n = x_t @ w_ih[2] + b_ih[2]
            h_r = h_prev @ w_hh[0] + b_hh[0]
            h_z = h_prev @ w_hh[1] + b_hh[1]
            h_n = h_prev @ w_hh[2] + b_hh[2]
            r = jax.nn.sigmoid(i_r + h_r)
            z = jax.nn.sigmoid(i_z + h_z)
            n = jnp.tanh(i_n + r * h_n)
            h_new = (1.0 - z) * n + z * h_prev
            return h_new, h_new

        h_f, outs = jax.lax.scan(step, h[l], jnp.swapaxes(layer_in, 0, 1))
        layer_in = jnp.swapaxes(outs, 0, 1)
        h_finals.append(h_f)
    out = jnp.maximum(layer_in, 0.0) @ params["fc_w"] + params["fc_b"][0]
    return out, jnp.stack(h_finals, axis=0)


# ------------------------------ param init ---------------------------------

def init_params(key):
    params = {"gru": []}
    k_gru = 1.0 / np.sqrt(HIDDEN_DIM)
    for l in range(N_LAYERS):
        in_dim = INPUT_DIM if l == 0 else HIDDEN_DIM
        key, k1, k2, k3, k4 = jax.random.split(key, 5)
        w_ih = jax.random.uniform(k1, (3, in_dim, HIDDEN_DIM), jnp.float32,
                                  -k_gru, k_gru)
        w_hh = jax.random.uniform(k2, (3, HIDDEN_DIM, HIDDEN_DIM), jnp.float32,
                                  -k_gru, k_gru)
        b_ih = jax.random.uniform(k3, (3, 1, HIDDEN_DIM), jnp.float32,
                                  -k_gru, k_gru)
        b_hh = jax.random.uniform(k4, (3, 1, HIDDEN_DIM), jnp.float32,
                                  -k_gru, k_gru)
        params["gru"].append((w_ih, w_hh, b_ih, b_hh))
    k_fc = 1.0 / np.sqrt(HIDDEN_DIM)
    key, k5, k6 = jax.random.split(key, 3)
    params["fc_w"] = jax.random.uniform(k5, (HIDDEN_DIM, OUTPUT_DIM),
                                        jnp.float32, -k_fc, k_fc)
    params["fc_b"] = jax.random.uniform(k6, (1, OUTPUT_DIM),
                                        jnp.float32, -k_fc, k_fc)
    return params


# --------------------------------- main -------------------------------------

if __name__ == "__main__":
    root = jax.random.PRNGKey(0)
    k_params, k_x, k_h = jax.random.split(root, 3)

    params = init_params(k_params)
    x = jax.random.normal(k_x, (BATCH, SEQ, INPUT_DIM), jnp.float32)
    h0 = jax.random.normal(k_h, (N_LAYERS, BATCH, HIDDEN_DIM), jnp.float32) * 0.1

    out, h_n = gru_net_forward(x, h0, params)
    out = jax.block_until_ready(out)
    h_n = jax.block_until_ready(h_n)

    out_ref, h_ref = gru_net_reference(x, h0, params)
    assert out.shape == (BATCH, SEQ, OUTPUT_DIM)
    assert h_n.shape == (N_LAYERS, BATCH, HIDDEN_DIM)
    np.testing.assert_allclose(np.asarray(out), np.asarray(out_ref),
                               rtol=1e-2, atol=1e-2)
    np.testing.assert_allclose(np.asarray(h_n), np.asarray(h_ref),
                               rtol=1e-2, atol=1e-2)

    print("KERNEL_OK")
</pallas_src>

<mosaic_0001>
module attributes {stable_mosaic.version = 11 : i64} {
  func.func @_grunet_fused_kernel(%arg0: memref<16x16xf32, #tpu.memory_space<vmem>>, %arg1: memref<2x2x32xf32, #tpu.memory_space<vmem>>, %arg2: memref<16x96xf32, #tpu.memory_space<vmem>>, %arg3: memref<32x96xf32, #tpu.memory_space<vmem>>, %arg4: memref<1x96xf32, #tpu.memory_space<vmem>>, %arg5: memref<1x32xf32, #tpu.memory_space<vmem>>, %arg6: memref<32x96xf32, #tpu.memory_space<vmem>>, %arg7: memref<32x96xf32, #tpu.memory_space<vmem>>, %arg8: memref<1x96xf32, #tpu.memory_space<vmem>>, %arg9: memref<1x32xf32, #tpu.memory_space<vmem>>, %arg10: memref<32x10xf32, #tpu.memory_space<vmem>>, %arg11: memref<1x10xf32, #tpu.memory_space<vmem>>, %arg12: memref<16x10xf32, #tpu.memory_space<vmem>>, %arg13: memref<2x2x32xf32, #tpu.memory_space<vmem>>) attributes {dimension_semantics = [], scalar_prefetch = 0 : i64, scratch_operands = 0 : i64, tpu.core_type = #tpu.core_type<tc>} {
    %c0 = arith.constant 0 : index
    %c0_0 = arith.constant 0 : index
    %0 = vector.load %arg0[%c0, %c0_0] : memref<16x16xf32, #tpu.memory_space<vmem>>, vector<16x16xf32>
    %c0_1 = arith.constant 0 : index
    %c0_2 = arith.constant 0 : index
    %c0_3 = arith.constant 0 : index
    %1 = vector.load %arg1[%c0_1, %c0_2, %c0_3] : memref<2x2x32xf32, #tpu.memory_space<vmem>>, vector<2x2x32xf32>
    %c0_4 = arith.constant 0 : index
    %c0_5 = arith.constant 0 : index
    %2 = vector.load %arg2[%c0_4, %c0_5] : memref<16x96xf32, #tpu.memory_space<vmem>>, vector<16x96xf32>
    %cst = arith.constant dense<0.000000e+00> : vector<16x96xf32>
    %3 = tpu.matmul %0, %2, %cst {dimension_numbers = #tpu.dot_dimension_numbers<[1], [0], [0], [1], [0, 0, 1, 1], [], []>} : vector<16x16xf32>, vector<16x96xf32>, vector<16x96xf32> -> vector<16x96xf32>
    %c0_6 = arith.constant 0 : index
    %c0_7 = arith.constant 0 : index
    %4 = vector.load %arg4[%c0_6, %c0_7] : memref<1x96xf32, #tpu.memory_space<vmem>>, vector<1x96xf32>
    %5 = vector.broadcast %4 : vector<1x96xf32> to vector<16x96xf32>
    %6 = arith.addf %3, %5 : vector<16x96xf32>
    %c0_8 = arith.constant 0 : index
    %c0_9 = arith.constant 0 : index
    %7 = vector.load %arg3[%c0_8, %c0_9] : memref<32x96xf32, #tpu.memory_space<vmem>>, vector<32x96xf32>
    %c0_10 = arith.constant 0 : index
    %c0_11 = arith.constant 0 : index
    %8 = vector.load %arg5[%c0_10, %c0_11] : memref<1x32xf32, #tpu.memory_space<vmem>>, vector<1x32xf32>
    %9 = vector.extract_strided_slice %1 {offsets = [0, 0, 0], sizes = [1, 2, 32], strides = [1, 1, 1]} : vector<2x2x32xf32> to vector<1x2x32xf32>
    %10 = vector.shape_cast %9 : vector<1x2x32xf32> to vector<2x32xf32>
    %11 = vector.extract_strided_slice %6 {offsets = [0, 0], sizes = [2, 96], strides = [1, 1]} : vector<16x96xf32> to vector<2x96xf32>
    %cst_12 = arith.constant dense<0.000000e+00> : vector<2x96xf32>
    %12 = tpu.matmul %10, %7, %cst_12 {dimension_numbers = #tpu.dot_dimension_numbers<[1], [0], [0], [1], [0, 0, 1, 1], [], []>} : vector<2x32xf32>, vector<32x96xf32>, vector<2x96xf32> -> vector<2x96xf32>
    %13 = vector.extract_strided_slice %11 {offsets = [0, 0], sizes = [2, 32], strides = [1, 1]} : vector<2x96xf32> to vector<2x32xf32>
    %14 = vector.extract_strided_slice %12 {offsets = [0, 0], sizes = [2, 32], strides = [1, 1]} : vector<2x96xf32> to vector<2x32xf32>
    %15 = arith.addf %13, %14 : vector<2x32xf32>
    %16 = arith.negf %15 : vector<2x32xf32>
    %17 = math.exp %16 : vector<2x32xf32>
    %cst_13 = arith.constant 1.000000e+00 : f32
    %18 = vector.broadcast %cst_13 : f32 to vector<2x32xf32>
    %19 = arith.addf %18, %17 : vector<2x32xf32>
    %20 = arith.divf %18, %19 : vector<2x32xf32>
    %21 = vector.extract_strided_slice %11 {offsets = [0, 32], sizes = [2, 32], strides = [1, 1]} : vector<2x96xf32> to vector<2x32xf32>
    %22 = vector.extract_strided_slice %12 {offsets = [0, 32], sizes = [2, 32], strides = [1, 1]} : vector<2x96xf32> to vector<2x32xf32>
    %23 = arith.addf %21, %22 : vector<2x32xf32>
    %24 = arith.negf %23 : vector<2x32xf32>
    %25 = math.exp %24 : vector<2x32xf32>
    %cst_14 = arith.constant 1.000000e+00 : f32
    %26 = vector.broadcast %cst_14 : f32 to vector<2x32xf32>
    %27 = arith.addf %26, %25 : vector<2x32xf32>
    %28 = arith.divf %26, %27 : vector<2x32xf32>
    %29 = vector.extract_strided_slice %11 {offsets = [0, 64], sizes = [2, 32], strides = [1, 1]} : vector<2x96xf32> to vector<2x32xf32>
    %30 = vector.extract_strided_slice %12 {offsets = [0, 64], sizes = [2, 32], strides = [1, 1]} : vector<2x96xf32> to vector<2x32xf32>
    %31 = vector.broadcast %8 : vector<1x32xf32> to vector<2x32xf32>
    %32 = arith.addf %30, %31 : vector<2x32xf32>
    %33 = arith.mulf %20, %32 : vector<2x32xf32>
    %34 = arith.addf %29, %33 : vector<2x32xf32>
    %35 = math.tanh %34 : vector<2x32xf32>
    %cst_15 = arith.constant 1.000000e+00 : f32
    %36 = vector.broadcast %cst_15 : f32 to vector<2x32xf32>
    %37 = arith.subf %36, %28 : vector<2x32xf32>
    %38 = arith.mulf %37, %35 : vector<2x32xf32>
    %39 = arith.mulf %28, %10 : vector<2x32xf32>
    %40 = arith.addf %38, %39 : vector<2x32xf32>
    %41 = vector.extract_strided_slice %6 {offsets = [2, 0], sizes = [2, 96], strides = [1, 1]} : vector<16x96xf32> to vector<2x96xf32>
    %cst_16 = arith.constant dense<0.000000e+00> : vector<2x96xf32>
    %42 = tpu.matmul %40, %7, %cst_16 {dimension_numbers = #tpu.dot_dimension_numbers<[1], [0], [0], [1], [0, 0, 1, 1], [], []>} : vector<2x32xf32>, vector<32x96xf32>, vector<2x96xf32> -> vector<2x96xf32>
    %43 = vector.extract_strided_slice %41 {offsets = [0, 0], sizes = [2, 32], strides = [1, 1]} : vector<2x96xf32> to vector<2x32xf32>
    %44 = vector.extract_strided_slice %42 {offsets = [0, 0], sizes = [2, 32], strides = [1, 1]} : vector<2x96xf32> to vector<2x32xf32>
    %45 = arith.addf %43, %44 : vector<2x32xf32>
    %46 = arith.negf %45 : vector<2x32xf32>
    %47 = math.exp %46 : vector<2x32xf32>
    %cst_17 = arith.constant 1.000000e+00 : f32
    %48 = vector.broadcast %cst_17 : f32 to vector<2x32xf32>
    %49 = arith.addf %48, %47 : vector<2x32xf32>
    %50 = arith.divf %48, %49 : vector<2x32xf32>
    %51 = vector.extract_strided_slice %41 {offsets = [0, 32], sizes = [2, 32], strides = [1, 1]} : vector<2x96xf32> to vector<2x32xf32>
    %52 = vector.extract_strided_slice %42 {offsets = [0, 32], sizes = [2, 32], strides = [1, 1]} : vector<2x96xf32> to vector<2x32xf32>
    %53 = arith.addf %51, %52 : vector<2x32xf32>
    %54 = arith.negf %53 : vector<2x32xf32>
    %55 = math.exp %54 : vector<2x32xf32>
    %cst_18 = arith.constant 1.000000e+00 : f32
    %56 = vector.broadcast %cst_18 : f32 to vector<2x32xf32>
    %57 = arith.addf %56, %55 : vector<2x32xf32>
    %58 = arith.divf %56, %57 : vector<2x32xf32>
    %59 = vector.extract_strided_slice %41 {offsets = [0, 64], sizes = [2, 32], strides = [1, 1]} : vector<2x96xf32> to vector<2x32xf32>
    %60 = vector.extract_strided_slice %42 {offsets = [0, 64], sizes = [2, 32], strides = [1, 1]} : vector<2x96xf32> to vector<2x32xf32>
    %61 = vector.broadcast %8 : vector<1x32xf32> to vector<2x32xf32>
    %62 = arith.addf %60, %61 : vector<2x32xf32>
    %63 = arith.mulf %50, %62 : vector<2x32xf32>
    %64 = arith.addf %59, %63 : vector<2x32xf32>
    %65 = math.tanh %64 : vector<2x32xf32>
    %cst_19 = arith.constant 1.000000e+00 : f32
    %66 = vector.broadcast %cst_19 : f32 to vector<2x32xf32>
    %67 = arith.subf %66, %58 : vector<2x32xf32>
    %68 = arith.mulf %67, %65 : vector<2x32xf32>
    %69 = arith.mulf %58, %40 : vector<2x32xf32>
    %70 = arith.addf %68, %69 : vector<2x32xf32>
    %71 = vector.extract_strided_slice %6 {offsets = [4, 0], sizes = [2, 96], strides = [1, 1]} : vector<16x96xf32> to vector<2x96xf32>
    %cst_20 = arith.constant dense<0.000000e+00> : vector<2x96xf32>
    %72 = tpu.matmul %70, %7, %cst_20 {dimension_numbers = #tpu.dot_dimension_numbers<[1], [0], [0], [1], [0, 0, 1, 1], [], []>} : vector<2x32xf32>, vector<32x96xf32>, vector<2x96xf32> -> vector<2x96xf32>
    %73 = vector.extract_strided_slice %71 {offsets = [0, 0], sizes = [2, 32], strides = [1, 1]} : vector<2x96xf32> to vector<2x32xf32>
    %74 = vector.extract_strided_slice %72 {offsets = [0, 0], sizes = [2, 32], strides = [1, 1]} : vector<2x96xf32> to vector<2x32xf32>
    %75 = arith.addf %73, %74 : vector<2x32xf32>
    %76 = arith.negf %75 : vector<2x32xf32>
    %77 = math.exp %76 : vector<2x32xf32>
    %cst_21 = arith.constant 1.000000e+00 : f32
    %78 = vector.broadcast %cst_21 : f32 to vector<2x32xf32>
    %79 = arith.addf %78, %77 : vector<2x32xf32>
    %80 = arith.divf %78, %79 : vector<2x32xf32>
    %81 = vector.extract_strided_slice %71 {offsets = [0, 32], sizes = [2, 32], strides = [1, 1]} : vector<2x96xf32> to vector<2x32xf32>
    %82 = vector.extract_strided_slice %72 {offsets = [0, 32], sizes = [2, 32], strides = [1, 1]} : vector<2x96xf32> to vector<2x32xf32>
    %83 = arith.addf %81, %82 : vector<2x32xf32>
    %84 = arith.negf %83 : vector<2x32xf32>
    %85 = math.exp %84 : vector<2x32xf32>
    %cst_22 = arith.constant 1.000000e+00 : f32
    %86 = vector.broadcast %cst_22 : f32 to vector<2x32xf32>
    %87 = arith.addf %86, %85 : vector<2x32xf32>
    %88 = arith.divf %86, %87 : vector<2x32xf32>
    %89 = vector.extract_strided_slice %71 {offsets = [0, 64], sizes = [2, 32], strides = [1, 1]} : vector<2x96xf32> to vector<2x32xf32>
    %90 = vector.extract_strided_slice %72 {offsets = [0, 64], sizes = [2, 32], strides = [1, 1]} : vector<2x96xf32> to vector<2x32xf32>
    %91 = vector.broadcast %8 : vector<1x32xf32> to vector<2x32xf32>
    %92 = arith.addf %90, %91 : vector<2x32xf32>
    %93 = arith.mulf %80, %92 : vector<2x32xf32>
    %94 = arith.addf %89, %93 : vector<2x32xf32>
    %95 = math.tanh %94 : vector<2x32xf32>
    %cst_23 = arith.constant 1.000000e+00 : f32
    %96 = vector.broadcast %cst_23 : f32 to vector<2x32xf32>
    %97 = arith.subf %96, %88 : vector<2x32xf32>
    %98 = arith.mulf %97, %95 : vector<2x32xf32>
    %99 = arith.mulf %88, %70 : vector<2x32xf32>
    %100 = arith.addf %98, %99 : vector<2x32xf32>
    %101 = vector.extract_strided_slice %6 {offsets = [6, 0], sizes = [2, 96], strides = [1, 1]} : vector<16x96xf32> to vector<2x96xf32>
    %cst_24 = arith.constant dense<0.000000e+00> : vector<2x96xf32>
    %102 = tpu.matmul %100, %7, %cst_24 {dimension_numbers = #tpu.dot_dimension_numbers<[1], [0], [0], [1], [0, 0, 1, 1], [], []>} : vector<2x32xf32>, vector<32x96xf32>, vector<2x96xf32> -> vector<2x96xf32>
    %103 = vector.extract_strided_slice %101 {offsets = [0, 0], sizes = [2, 32], strides = [1, 1]} : vector<2x96xf32> to vector<2x32xf32>
    %104 = vector.extract_strided_slice %102 {offsets = [0, 0], sizes = [2, 32], strides = [1, 1]} : vector<2x96xf32> to vector<2x32xf32>
    %105 = arith.addf %103, %104 : vector<2x32xf32>
    %106 = arith.negf %105 : vector<2x32xf32>
    %107 = math.exp %106 : vector<2x32xf32>
    %cst_25 = arith.constant 1.000000e+00 : f32
    %108 = vector.broadcast %cst_25 : f32 to vector<2x32xf32>
    %109 = arith.addf %108, %107 : vector<2x32xf32>
    %110 = arith.divf %108, %109 : vector<2x32xf32>
    %111 = vector.extract_strided_slice %101 {offsets = [0, 32], sizes = [2, 32], strides = [1, 1]} : vector<2x96xf32> to vector<2x32xf32>
    %112 = vector.extract_strided_slice %102 {offsets = [0, 32], sizes = [2, 32], strides = [1, 1]} : vector<2x96xf32> to vector<2x32xf32>
    %113 = arith.addf %111, %112 : vector<2x32xf32>
    %114 = arith.negf %113 : vector<2x32xf32>
    %115 = math.exp %114 : vector<2x32xf32>
    %cst_26 = arith.constant 1.000000e+00 : f32
    %116 = vector.broadcast %cst_26 : f32 to vector<2x32xf32>
    %117 = arith.addf %116, %115 : vector<2x32xf32>
    %118 = arith.divf %116, %117 : vector<2x32xf32>
    %119 = vector.extract_strided_slice %101 {offsets = [0, 64], sizes = [2, 32], strides = [1, 1]} : vector<2x96xf32> to vector<2x32xf32>
    %120 = vector.extract_strided_slice %102 {offsets = [0, 64], sizes = [2, 32], strides = [1, 1]} : vector<2x96xf32> to vector<2x32xf32>
    %121 = vector.broadcast %8 : vector<1x32xf32> to vector<2x32xf32>
    %122 = arith.addf %120, %121 : vector<2x32xf32>
    %123 = arith.mulf %110, %122 : vector<2x32xf32>
    %124 = arith.addf %119, %123 : vector<2x32xf32>
    %125 = math.tanh %124 : vector<2x32xf32>
    %cst_27 = arith.constant 1.000000e+00 : f32
    %126 = vector.broadcast %cst_27 : f32 to vector<2x32xf32>
    %127 = arith.subf %126, %118 : vector<2x32xf32>
    %128 = arith.mulf %127, %125 : vector<2x32xf32>
    %129 = arith.mulf %118, %100 : vector<2x32xf32>
    %130 = arith.addf %128, %129 : vector<2x32xf32>
    %131 = vector.extract_strided_slice %6 {offsets = [8, 0], sizes = [2, 96], strides = [1, 1]} : vector<16x96xf32> to vector<2x96xf32>
    %cst_28 = arith.constant dense<0.000000e+00> : vector<2x96xf32>
    %132 = tpu.matmul %130, %7, %cst_28 {dimension_numbers = #tpu.dot_dimension_numbers<[1], [0], [0], [1], [0, 0, 1, 1], [], []>} : vector<2x32xf32>, vector<32x96xf32>, vector<2x96xf32> -> vector<2x96xf32>
    %133 = vector.extract_strided_slice %131 {offsets = [0, 0], sizes = [2, 32], strides = [1, 1]} : vector<2x96xf32> to vector<2x32xf32>
    %134 = vector.extract_strided_slice %132 {offsets = [0, 0], sizes = [2, 32], strides = [1, 1]} : vector<2x96xf32> to vector<2x32xf32>
    %135 = arith.addf %133, %134 : vector<2x32xf32>
    %136 = arith.negf %135 : vector<2x32xf32>
    %137 = math.exp %136 : vector<2x32xf32>
    %cst_29 = arith.constant 1.000000e+00 : f32
    %138 = vector.broadcast %cst_29 : f32 to vector<2x32xf32>
    %139 = arith.addf %138, %137 : vector<2x32xf32>
    %140 = arith.divf %138, %139 : vector<2x32xf32>
    %141 = vector.extract_strided_slice %131 {offsets = [0, 32], sizes = [2, 32], strides = [1, 1]} : vector<2x96xf32> to vector<2x32xf32>
    %142 = vector.extract_strided_slice %132 {offsets = [0, 32], sizes = [2, 32], strides = [1, 1]} : vector<2x96xf32> to vector<2x32xf32>
    %143 = arith.addf %141, %142 : vector<2x32xf32>
    %144 = arith.negf %143 : vector<2x32xf32>
    %145 = math.exp %144 : vector<2x32xf32>
    %cst_30 = arith.constant 1.000000e+00 : f32
    %146 = vector.broadcast %cst_30 : f32 to vector<2x32xf32>
    %147 = arith.addf %146, %145 : vector<2x32xf32>
    %148 = arith.divf %146, %147 : vector<2x32xf32>
    %149 = vector.extract_strided_slice %131 {offsets = [0, 64], sizes = [2, 32], strides = [1, 1]} : vector<2x96xf32> to vector<2x32xf32>
    %150 = vector.extract_strided_slice %132 {offsets = [0, 64], sizes = [2, 32], strides = [1, 1]} : vector<2x96xf32> to vector<2x32xf32>
    %151 = vector.broadcast %8 : vector<1x32xf32> to vector<2x32xf32>
    %152 = arith.addf %150, %151 : vector<2x32xf32>
    %153 = arith.mulf %140, %152 : vector<2x32xf32>
    %154 = arith.addf %149, %153 : vector<2x32xf32>
    %155 = math.tanh %154 : vector<2x32xf32>
    %cst_31 = arith.constant 1.000000e+00 : f32
    %156 = vector.broadcast %cst_31 : f32 to vector<2x32xf32>
    %157 = arith.subf %156, %148 : vector<2x32xf32>
    %158 = arith.mulf %157, %155 : vector<2x32xf32>
    %159 = arith.mulf %148, %130 : vector<2x32xf32>
    %160 = arith.addf %158, %159 : vector<2x32xf32>
    %161 = vector.extract_strided_slice %6 {offsets = [10, 0], sizes = [2, 96], strides = [1, 1]} : vector<16x96xf32> to vector<2x96xf32>
    %cst_32 = arith.constant dense<0.000000e+00> : vector<2x96xf32>
    %162 = tpu.matmul %160, %7, %cst_32 {dimension_numbers = #tpu.dot_dimension_numbers<[1], [0], [0], [1], [0, 0, 1, 1], [], []>} : vector<2x32xf32>, vector<32x96xf32>, vector<2x96xf32> -> vector<2x96xf32>
    %163 = vector.extract_strided_slice %161 {offsets = [0, 0], sizes = [2, 32], strides = [1, 1]} : vector<2x96xf32> to vector<2x32xf32>
    %164 = vector.extract_strided_slice %162 {offsets = [0, 0], sizes = [2, 32], strides = [1, 1]} : vector<2x96xf32> to vector<2x32xf32>
    %165 = arith.addf %163, %164 : vector<2x32xf32>
    %166 = arith.negf %165 : vector<2x32xf32>
    %167 = math.exp %166 : vector<2x32xf32>
    %cst_33 = arith.constant 1.000000e+00 : f32
    %168 = vector.broadcast %cst_33 : f32 to vector<2x32xf32>
    %169 = arith.addf %168, %167 : vector<2x32xf32>
    %170 = arith.divf %168, %169 : vector<2x32xf32>
    %171 = vector.extract_strided_slice %161 {offsets = [0, 32], sizes = [2, 32], strides = [1, 1]} : vector<2x96xf32> to vector<2x32xf32>
    %172 = vector.extract_strided_slice %162 {offsets = [0, 32], sizes = [2, 32], strides = [1, 1]} : vector<2x96xf32> to vector<2x32xf32>
    %173 = arith.addf %171, %172 : vector<2x32xf32>
    %174 = arith.negf %173 : vector<2x32xf32>
    %175 = math.exp %174 : vector<2x32xf32>
    %cst_34 = arith.constant 1.000000e+00 : f32
    %176 = vector.broadcast %cst_34 : f32 to vector<2x32xf32>
    %177 = arith.addf %176, %175 : vector<2x32xf32>
    %178 = arith.divf %176, %177 : vector<2x32xf32>
    %179 = vector.extract_strided_slice %161 {offsets = [0, 64], sizes = [2, 32], strides = [1, 1]} : vector<2x96xf32> to vector<2x32xf32>
    %180 = vector.extract_strided_slice %162 {offsets = [0, 64], sizes = [2, 32], strides = [1, 1]} : vector<2x96xf32> to vector<2x32xf32>
    %181 = vector.broadcast %8 : vector<1x32xf32> to vector<2x32xf32>
    %182 = arith.addf %180, %181 : vector<2x32xf32>
    %183 = arith.mulf %170, %182 : vector<2x32xf32>
    %184 = arith.addf %179, %183 : vector<2x32xf32>
    %185 = math.tanh %184 : vector<2x32xf32>
    %cst_35 = arith.constant 1.000000e+00 : f32
    %186 = vector.broadcast %cst_35 : f32 to vector<2x32xf32>
    %187 = arith.subf %186, %178 : vector<2x32xf32>
    %188 = arith.mulf %187, %185 : vector<2x32xf32>
    %189 = arith.mulf %178, %160 : vector<2x32xf32>
    %190 = arith.addf %188, %189 : vector<2x32xf32>
    %191 = vector.extract_strided_slice %6 {offsets = [12, 0], sizes = [2, 96], strides = [1, 1]} : vector<16x96xf32> to vector<2x96xf32>
    %cst_36 = arith.constant dense<0.000000e+00> : vector<2x96xf32>
    %192 = tpu.matmul %190, %7, %cst_36 {dimension_numbers = #tpu.dot_dimension_numbers<[1], [0], [0], [1], [0, 0, 1, 1], [], []>} : vector<2x32xf32>, vector<32x96xf32>, vector<2x96xf32> -> vector<2x96xf32>
    %193 = vector.extract_strided_slice %191 {offsets = [0, 0], sizes = [2, 32], strides = [1, 1]} : vector<2x96xf32> to vector<2x32xf32>
    %194 = vector.extract_strided_slice %192 {offsets = [0, 0], sizes = [2, 32], strides = [1, 1]} : vector<2x96xf32> to vector<2x32xf32>
    %195 = arith.addf %193, %194 : vector<2x32xf32>
    %196 = arith.negf %195 : vector<2x32xf32>
    %197 = math.exp %196 : vector<2x32xf32>
    %cst_37 = arith.constant 1.000000e+00 : f32
    %198 = vector.broadcast %cst_37 : f32 to vector<2x32xf32>
    %199 = arith.addf %198, %197 : vector<2x32xf32>
    %200 = arith.divf %198, %199 : vector<2x32xf32>
    %201 = vector.extract_strided_slice %191 {offsets = [0, 32], sizes = [2, 32], strides = [1, 1]} : vector<2x96xf32> to vector<2x32xf32>
    %202 = vector.extract_strided_slice %192 {offsets = [0, 32], sizes = [2, 32], strides = [1, 1]} : vector<2x96xf32> to vector<2x32xf32>
    %203 = arith.addf %201, %202 : vector<2x32xf32>
    %204 = arith.negf %203 : vector<2x32xf32>
    %205 = math.exp %204 : vector<2x32xf32>
    %cst_38 = arith.constant 1.000000e+00 : f32
    %206 = vector.broadcast %cst_38 : f32 to vector<2x32xf32>
    %207 = arith.addf %206, %205 : vector<2x32xf32>
    %208 = arith.divf %206, %207 : vector<2x32xf32>
    %209 = vector.extract_strided_slice %191 {offsets = [0, 64], sizes = [2, 32], strides = [1, 1]} : vector<2x96xf32> to vector<2x32xf32>
    %210 = vector.extract_strided_slice %192 {offsets = [0, 64], sizes = [2, 32], strides = [1, 1]} : vector<2x96xf32> to vector<2x32xf32>
    %211 = vector.broadcast %8 : vector<1x32xf32> to vector<2x32xf32>
    %212 = arith.addf %210, %211 : vector<2x32xf32>
    %213 = arith.mulf %200, %212 : vector<2x32xf32>
    %214 = arith.addf %209, %213 : vector<2x32xf32>
    %215 = math.tanh %214 : vector<2x32xf32>
    %cst_39 = arith.constant 1.000000e+00 : f32
    %216 = vector.broadcast %cst_39 : f32 to vector<2x32xf32>
    %217 = arith.subf %216, %208 : vector<2x32xf32>
    %218 = arith.mulf %217, %215 : vector<2x32xf32>
    %219 = arith.mulf %208, %190 : vector<2x32xf32>
    %220 = arith.addf %218, %219 : vector<2x32xf32>
    %221 = vector.extract_strided_slice %6 {offsets = [14, 0], sizes = [2, 96], strides = [1, 1]} : vector<16x96xf32> to vector<2x96xf32>
    %cst_40 = arith.constant dense<0.000000e+00> : vector<2x96xf32>
    %222 = tpu.matmul %220, %7, %cst_40 {dimension_numbers = #tpu.dot_dimension_numbers<[1], [0], [0], [1], [0, 0, 1, 1], [], []>} : vector<2x32xf32>, vector<32x96xf32>, vector<2x96xf32> -> vector<2x96xf32>
    %223 = vector.extract_strided_slice %221 {offsets = [0, 0], sizes = [2, 32], strides = [1, 1]} : vector<2x96xf32> to vector<2x32xf32>
    %224 = vector.extract_strided_slice %222 {offsets = [0, 0], sizes = [2, 32], strides = [1, 1]} : vector<2x96xf32> to vector<2x32xf32>
    %225 = arith.addf %223, %224 : vector<2x32xf32>
    %226 = arith.negf %225 : vector<2x32xf32>
    %227 = math.exp %226 : vector<2x32xf32>
    %cst_41 = arith.constant 1.000000e+00 : f32
    %228 = vector.broadcast %cst_41 : f32 to vector<2x32xf32>
    %229 = arith.addf %228, %227 : vector<2x32xf32>
    %230 = arith.divf %228, %229 : vector<2x32xf32>
    %231 = vector.extract_strided_slice %221 {offsets = [0, 32], sizes = [2, 32], strides = [1, 1]} : vector<2x96xf32> to vector<2x32xf32>
    %232 = vector.extract_strided_slice %222 {offsets = [0, 32], sizes = [2, 32], strides = [1, 1]} : vector<2x96xf32> to vector<2x32xf32>
    %233 = arith.addf %231, %232 : vector<2x32xf32>
    %234 = arith.negf %233 : vector<2x32xf32>
    %235 = math.exp %234 : vector<2x32xf32>
    %cst_42 = arith.constant 1.000000e+00 : f32
    %236 = vector.broadcast %cst_42 : f32 to vector<2x32xf32>
    %237 = arith.addf %236, %235 : vector<2x32xf32>
    %238 = arith.divf %236, %237 : vector<2x32xf32>
    %239 = vector.extract_strided_slice %221 {offsets = [0, 64], sizes = [2, 32], strides = [1, 1]} : vector<2x96xf32> to vector<2x32xf32>
    %240 = vector.extract_strided_slice %222 {offsets = [0, 64], sizes = [2, 32], strides = [1, 1]} : vector<2x96xf32> to vector<2x32xf32>
    %241 = vector.broadcast %8 : vector<1x32xf32> to vector<2x32xf32>
    %242 = arith.addf %240, %241 : vector<2x32xf32>
    %243 = arith.mulf %230, %242 : vector<2x32xf32>
    %244 = arith.addf %239, %243 : vector<2x32xf32>
    %245 = math.tanh %244 : vector<2x32xf32>
    %cst_43 = arith.constant 1.000000e+00 : f32
    %246 = vector.broadcast %cst_43 : f32 to vector<2x32xf32>
    %247 = arith.subf %246, %238 : vector<2x32xf32>
    %248 = arith.mulf %247, %245 : vector<2x32xf32>
    %249 = arith.mulf %238, %220 : vector<2x32xf32>
    %250 = arith.addf %248, %249 : vector<2x32xf32>
    %251 = tpu.concatenate %40, %70, %100, %130, %160, %190, %220, %250 in 0 : vector<2x32xf32>, vector<2x32xf32>, vector<2x32xf32>, vector<2x32xf32>, vector<2x32xf32>, vector<2x32xf32>, vector<2x32xf32>, vector<2x32xf32> -> vector<16x32xf32>
    %c0_44 = arith.constant 0 : index
    %c0_45 = arith.constant 0 : index
    %252 = vector.load %arg6[%c0_44, %c0_45] : memref<32x96xf32, #tpu.memory_space<vmem>>, vector<32x96xf32>
    %cst_46 = arith.constant dense<0.000000e+00> : vector<16x96xf32>
    %253 = tpu.matmul %251, %252, %cst_46 {dimension_numbers = #tpu.dot_dimension_numbers<[1], [0], [0], [1], [0, 0, 1, 1], [], []>} : vector<16x32xf32>, vector<32x96xf32>, vector<16x96xf32> -> vector<16x96xf32>
    %c0_47 = arith.constant 0 : index
    %c0_48 = arith.constant 0 : index
    %254 = vector.load %arg8[%c0_47, %c0_48] : memref<1x96xf32, #tpu.memory_space<vmem>>, vector<1x96xf32>
    %255 = vector.broadcast %254 : vector<1x96xf32> to vector<16x96xf32>
    %256 = arith.addf %253, %255 : vector<16x96xf32>
    %c0_49 = arith.constant 0 : index
    %c0_50 = arith.constant 0 : index
    %257 = vector.load %arg7[%c0_49, %c0_50] : memref<32x96xf32, #tpu.memory_space<vmem>>, vector<32x96xf32>
    %c0_51 = arith.constant 0 : index
    %c0_52 = arith.constant 0 : index
    %258 = vector.load %arg9[%c0_51, %c0_52] : memref<1x32xf32, #tpu.memory_space<vmem>>, vector<1x32xf32>
    %259 = vector.extract_strided_slice %1 {offsets = [1, 0, 0], sizes = [1, 2, 32], strides = [1, 1, 1]} : vector<2x2x32xf32> to vector<1x2x32xf32>
    %260 = vector.shape_cast %259 : vector<1x2x32xf32> to vector<2x32xf32>
    %261 = vector.extract_strided_slice %256 {offsets = [0, 0], sizes = [2, 96], strides = [1, 1]} : vector<16x96xf32> to vector<2x96xf32>
    %cst_53 = arith.constant dense<0.000000e+00> : vector<2x96xf32>
    %262 = tpu.matmul %260, %257, %cst_53 {dimension_numbers = #tpu.dot_dimension_numbers<[1], [0], [0], [1], [0, 0, 1, 1], [], []>} : vector<2x32xf32>, vector<32x96xf32>, vector<2x96xf32> -> vector<2x96xf32>
    %263 = vector.extract_strided_slice %261 {offsets = [0, 0], sizes = [2, 32], strides = [1, 1]} : vector<2x96xf32> to vector<2x32xf32>
    %264 = vector.extract_strided_slice %262 {offsets = [0, 0], sizes = [2, 32], strides = [1, 1]} : vector<2x96xf32> to vector<2x32xf32>
    %265 = arith.addf %263, %264 : vector<2x32xf32>
    %266 = arith.negf %265 : vector<2x32xf32>
    %267 = math.exp %266 : vector<2x32xf32>
    %cst_54 = arith.constant 1.000000e+00 : f32
    %268 = vector.broadcast %cst_54 : f32 to vector<2x32xf32>
    %269 = arith.addf %268, %267 : vector<2x32xf32>
    %270 = arith.divf %268, %269 : vector<2x32xf32>
    %271 = vector.extract_strided_slice %261 {offsets = [0, 32], sizes = [2, 32], strides = [1, 1]} : vector<2x96xf32> to vector<2x32xf32>
    %272 = vector.extract_strided_slice %262 {offsets = [0, 32], sizes = [2, 32], strides = [1, 1]} : vector<2x96xf32> to vector<2x32xf32>
    %273 = arith.addf %271, %272 : vector<2x32xf32>
    %274 = arith.negf %273 : vector<2x32xf32>
    %275 = math.exp %274 : vector<2x32xf32>
    %cst_55 = arith.constant 1.000000e+00 : f32
    %276 = vector.broadcast %cst_55 : f32 to vector<2x32xf32>
    %277 = arith.addf %276, %275 : vector<2x32xf32>
    %278 = arith.divf %276, %277 : vector<2x32xf32>
    %279 = vector.extract_strided_slice %261 {offsets = [0, 64], sizes = [2, 32], strides = [1, 1]} : vector<2x96xf32> to vector<2x32xf32>
    %280 = vector.extract_strided_slice %262 {offsets = [0, 64], sizes = [2, 32], strides = [1, 1]} : vector<2x96xf32> to vector<2x32xf32>
    %281 = vector.broadcast %258 : vector<1x32xf32> to vector<2x32xf32>
    %282 = arith.addf %280, %281 : vector<2x32xf32>
    %283 = arith.mulf %270, %282 : vector<2x32xf32>
    %284 = arith.addf %279, %283 : vector<2x32xf32>
    %285 = math.tanh %284 : vector<2x32xf32>
    %cst_56 = arith.constant 1.000000e+00 : f32
    %286 = vector.broadcast %cst_56 : f32 to vector<2x32xf32>
    %287 = arith.subf %286, %278 : vector<2x32xf32>
    %288 = arith.mulf %287, %285 : vector<2x32xf32>
    %289 = arith.mulf %278, %260 : vector<2x32xf32>
    %290 = arith.addf %288, %289 : vector<2x32xf32>
    %291 = vector.extract_strided_slice %256 {offsets = [2, 0], sizes = [2, 96], strides = [1, 1]} : vector<16x96xf32> to vector<2x96xf32>
    %cst_57 = arith.constant dense<0.000000e+00> : vector<2x96xf32>
    %292 = tpu.matmul %290, %257, %cst_57 {dimension_numbers = #tpu.dot_dimension_numbers<[1], [0], [0], [1], [0, 0, 1, 1], [], []>} : vector<2x32xf32>, vector<32x96xf32>, vector<2x96xf32> -> vector<2x96xf32>
    %293 = vector.extract_strided_slice %291 {offsets = [0, 0], sizes = [2, 32], strides = [1, 1]} : vector<2x96xf32> to vector<2x32xf32>
    %294 = vector.extract_strided_slice %292 {offsets = [0, 0], sizes = [2, 32], strides = [1, 1]} : vector<2x96xf32> to vector<2x32xf32>
    %295 = arith.addf %293, %294 : vector<2x32xf32>
    %296 = arith.negf %295 : vector<2x32xf32>
    %297 = math.exp %296 : vector<2x32xf32>
    %cst_58 = arith.constant 1.000000e+00 : f32
    %298 = vector.broadcast %cst_58 : f32 to vector<2x32xf32>
    %299 = arith.addf %298, %297 : vector<2x32xf32>
    %300 = arith.divf %298, %299 : vector<2x32xf32>
    %301 = vector.extract_strided_slice %291 {offsets = [0, 32], sizes = [2, 32], strides = [1, 1]} : vector<2x96xf32> to vector<2x32xf32>
    %302 = vector.extract_strided_slice %292 {offsets = [0, 32], sizes = [2, 32], strides = [1, 1]} : vector<2x96xf32> to vector<2x32xf32>
    %303 = arith.addf %301, %302 : vector<2x32xf32>
    %304 = arith.negf %303 : vector<2x32xf32>
    %305 = math.exp %304 : vector<2x32xf32>
    %cst_59 = arith.constant 1.000000e+00 : f32
    %306 = vector.broadcast %cst_59 : f32 to vector<2x32xf32>
    %307 = arith.addf %306, %305 : vector<2x32xf32>
    %308 = arith.divf %306, %307 : vector<2x32xf32>
    %309 = vector.extract_strided_slice %291 {offsets = [0, 64], sizes = [2, 32], strides = [1, 1]} : vector<2x96xf32> to vector<2x32xf32>
    %310 = vector.extract_strided_slice %292 {offsets = [0, 64], sizes = [2, 32], strides = [1, 1]} : vector<2x96xf32> to vector<2x32xf32>
    %311 = vector.broadcast %258 : vector<1x32xf32> to vector<2x32xf32>
    %312 = arith.addf %310, %311 : vector<2x32xf32>
    %313 = arith.mulf %300, %312 : vector<2x32xf32>
    %314 = arith.addf %309, %313 : vector<2x32xf32>
    %315 = math.tanh %314 : vector<2x32xf32>
    %cst_60 = arith.constant 1.000000e+00 : f32
    %316 = vector.broadcast %cst_60 : f32 to vector<2x32xf32>
    %317 = arith.subf %316, %308 : vector<2x32xf32>
    %318 = arith.mulf %317, %315 : vector<2x32xf32>
    %319 = arith.mulf %308, %290 : vector<2x32xf32>
    %320 = arith.addf %318, %319 : vector<2x32xf32>
    %321 = vector.extract_strided_slice %256 {offsets = [4, 0], sizes = [2, 96], strides = [1, 1]} : vector<16x96xf32> to vector<2x96xf32>
    %cst_61 = arith.constant dense<0.000000e+00> : vector<2x96xf32>
    %322 = tpu.matmul %320, %257, %cst_61 {dimension_numbers = #tpu.dot_dimension_numbers<[1], [0], [0], [1], [0, 0, 1, 1], [], []>} : vector<2x32xf32>, vector<32x96xf32>, vector<2x96xf32> -> vector<2x96xf32>
    %323 = vector.extract_strided_slice %321 {offsets = [0, 0], sizes = [2, 32], strides = [1, 1]} : vector<2x96xf32> to vector<2x32xf32>
    %324 = vector.extract_strided_slice %322 {offsets = [0, 0], sizes = [2, 32], strides = [1, 1]} : vector<2x96xf32> to vector<2x32xf32>
    %325 = arith.addf %323, %324 : vector<2x32xf32>
    %326 = arith.negf %325 : vector<2x32xf32>
    %327 = math.exp %326 : vector<2x32xf32>
    %cst_62 = arith.constant 1.000000e+00 : f32
    %328 = vector.broadcast %cst_62 : f32 to vector<2x32xf32>
    %329 = arith.addf %328, %327 : vector<2x32xf32>
    %330 = arith.divf %328, %329 : vector<2x32xf32>
    %331 = vector.extract_strided_slice %321 {offsets = [0, 32], sizes = [2, 32], strides = [1, 1]} : vector<2x96xf32> to vector<2x32xf32>
    %332 = vector.extract_strided_slice %322 {offsets = [0, 32], sizes = [2, 32], strides = [1, 1]} : vector<2x96xf32> to vector<2x32xf32>
    %333 = arith.addf %331, %332 : vector<2x32xf32>
    %334 = arith.negf %333 : vector<2x32xf32>
    %335 = math.exp %334 : vector<2x32xf32>
    %cst_63 = arith.constant 1.000000e+00 : f32
    %336 = vector.broadcast %cst_63 : f32 to vector<2x32xf32>
    %337 = arith.addf %336, %335 : vector<2x32xf32>
    %338 = arith.divf %336, %337 : vector<2x32xf32>
    %339 = vector.extract_strided_slice %321 {offsets = [0, 64], sizes = [2, 32], strides = [1, 1]} : vector<2x96xf32> to vector<2x32xf32>
    %340 = vector.extract_strided_slice %322 {offsets = [0, 64], sizes = [2, 32], strides = [1, 1]} : vector<2x96xf32> to vector<2x32xf32>
    %341 = vector.broadcast %258 : vector<1x32xf32> to vector<2x32xf32>
    %342 = arith.addf %340, %341 : vector<2x32xf32>
    %343 = arith.mulf %330, %342 : vector<2x32xf32>
    %344 = arith.addf %339, %343 : vector<2x32xf32>
    %345 = math.tanh %344 : vector<2x32xf32>
    %cst_64 = arith.constant 1.000000e+00 : f32
    %346 = vector.broadcast %cst_64 : f32 to vector<2x32xf32>
    %347 = arith.subf %346, %338 : vector<2x32xf32>
    %348 = arith.mulf %347, %345 : vector<2x32xf32>
    %349 = arith.mulf %338, %320 : vector<2x32xf32>
    %350 = arith.addf %348, %349 : vector<2x32xf32>
    %351 = vector.extract_strided_slice %256 {offsets = [6, 0], sizes = [2, 96], strides = [1, 1]} : vector<16x96xf32> to vector<2x96xf32>
    %cst_65 = arith.constant dense<0.000000e+00> : vector<2x96xf32>
    %352 = tpu.matmul %350, %257, %cst_65 {dimension_numbers = #tpu.dot_dimension_numbers<[1], [0], [0], [1], [0, 0, 1, 1], [], []>} : vector<2x32xf32>, vector<32x96xf32>, vector<2x96xf32> -> vector<2x96xf32>
    %353 = vector.extract_strided_slice %351 {offsets = [0, 0], sizes = [2, 32], strides = [1, 1]} : vector<2x96xf32> to vector<2x32xf32>
    %354 = vector.extract_strided_slice %352 {offsets = [0, 0], sizes = [2, 32], strides = [1, 1]} : vector<2x96xf32> to vector<2x32xf32>
    %355 = arith.addf %353, %354 : vector<2x32xf32>
    %356 = arith.negf %355 : vector<2x32xf32>
    %357 = math.exp %356 : vector<2x32xf32>
    %cst_66 = arith.constant 1.000000e+00 : f32
    %358 = vector.broadcast %cst_66 : f32 to vector<2x32xf32>
    %359 = arith.addf %358, %357 : vector<2x32xf32>
    %360 = arith.divf %358, %359 : vector<2x32xf32>
    %361 = vector.extract_strided_slice %351 {offsets = [0, 32], sizes = [2, 32], strides = [1, 1]} : vector<2x96xf32> to vector<2x32xf32>
    %362 = vector.extract_strided_slice %352 {offsets = [0, 32], sizes = [2, 32], strides = [1, 1]} : vector<2x96xf32> to vector<2x32xf32>
    %363 = arith.addf %361, %362 : vector<2x32xf32>
    %364 = arith.negf %363 : vector<2x32xf32>
    %365 = math.exp %364 : vector<2x32xf32>
    %cst_67 = arith.constant 1.000000e+00 : f32
    %366 = vector.broadcast %cst_67 : f32 to vector<2x32xf32>
    %367 = arith.addf %366, %365 : vector<2x32xf32>
    %368 = arith.divf %366, %367 : vector<2x32xf32>
    %369 = vector.extract_strided_slice %351 {offsets = [0, 64], sizes = [2, 32], strides = [1, 1]} : vector<2x96xf32> to vector<2x32xf32>
    %370 = vector.extract_strided_slice %352 {offsets = [0, 64], sizes = [2, 32], strides = [1, 1]} : vector<2x96xf32> to vector<2x32xf32>
    %371 = vector.broadcast %258 : vector<1x32xf32> to vector<2x32xf32>
    %372 = arith.addf %370, %371 : vector<2x32xf32>
    %373 = arith.mulf %360, %372 : vector<2x32xf32>
    %374 = arith.addf %369, %373 : vector<2x32xf32>
    %375 = math.tanh %374 : vector<2x32xf32>
    %cst_68 = arith.constant 1.000000e+00 : f32
    %376 = vector.broadcast %cst_68 : f32 to vector<2x32xf32>
    %377 = arith.subf %376, %368 : vector<2x32xf32>
    %378 = arith.mulf %377, %375 : vector<2x32xf32>
    %379 = arith.mulf %368, %350 : vector<2x32xf32>
    %380 = arith.addf %378, %379 : vector<2x32xf32>
    %381 = vector.extract_strided_slice %256 {offsets = [8, 0], sizes = [2, 96], strides = [1, 1]} : vector<16x96xf32> to vector<2x96xf32>
    %cst_69 = arith.constant dense<0.000000e+00> : vector<2x96xf32>
    %382 = tpu.matmul %380, %257, %cst_69 {dimension_numbers = #tpu.dot_dimension_numbers<[1], [0], [0], [1], [0, 0, 1, 1], [], []>} : vector<2x32xf32>, vector<32x96xf32>, vector<2x96xf32> -> vector<2x96xf32>
    %383 = vector.extract_strided_slice %381 {offsets = [0, 0], sizes = [2, 32], strides = [1, 1]} : vector<2x96xf32> to vector<2x32xf32>
    %384 = vector.extract_strided_slice %382 {offsets = [0, 0], sizes = [2, 32], strides = [1, 1]} : vector<2x96xf32> to vector<2x32xf32>
    %385 = arith.addf %383, %384 : vector<2x32xf32>
    %386 = arith.negf %385 : vector<2x32xf32>
    %387 = math.exp %386 : vector<2x32xf32>
    %cst_70 = arith.constant 1.000000e+00 : f32
    %388 = vector.broadcast %cst_70 : f32 to vector<2x32xf32>
    %389 = arith.addf %388, %387 : vector<2x32xf32>
    %390 = arith.divf %388, %389 : vector<2x32xf32>
    %391 = vector.extract_strided_slice %381 {offsets = [0, 32], sizes = [2, 32], strides = [1, 1]} : vector<2x96xf32> to vector<2x32xf32>
    %392 = vector.extract_strided_slice %382 {offsets = [0, 32], sizes = [2, 32], strides = [1, 1]} : vector<2x96xf32> to vector<2x32xf32>
    %393 = arith.addf %391, %392 : vector<2x32xf32>
    %394 = arith.negf %393 : vector<2x32xf32>
    %395 = math.exp %394 : vector<2x32xf32>
    %cst_71 = arith.constant 1.000000e+00 : f32
    %396 = vector.broadcast %cst_71 : f32 to vector<2x32xf32>
    %397 = arith.addf %396, %395 : vector<2x32xf32>
    %398 = arith.divf %396, %397 : vector<2x32xf32>
    %399 = vector.extract_strided_slice %381 {offsets = [0, 64], sizes = [2, 32], strides = [1, 1]} : vector<2x96xf32> to vector<2x32xf32>
    %400 = vector.extract_strided_slice %382 {offsets = [0, 64], sizes = [2, 32], strides = [1, 1]} : vector<2x96xf32> to vector<2x32xf32>
    %401 = vector.broadcast %258 : vector<1x32xf32> to vector<2x32xf32>
    %402 = arith.addf %400, %401 : vector<2x32xf32>
    %403 = arith.mulf %390, %402 : vector<2x32xf32>
    %404 = arith.addf %399, %403 : vector<2x32xf32>
    %405 = math.tanh %404 : vector<2x32xf32>
    %cst_72 = arith.constant 1.000000e+00 : f32
    %406 = vector.broadcast %cst_72 : f32 to vector<2x32xf32>
    %407 = arith.subf %406, %398 : vector<2x32xf32>
    %408 = arith.mulf %407, %405 : vector<2x32xf32>
    %409 = arith.mulf %398, %380 : vector<2x32xf32>
    %410 = arith.addf %408, %409 : vector<2x32xf32>
    %411 = vector.extract_strided_slice %256 {offsets = [10, 0], sizes = [2, 96], strides = [1, 1]} : vector<16x96xf32> to vector<2x96xf32>
    %cst_73 = arith.constant dense<0.000000e+00> : vector<2x96xf32>
    %412 = tpu.matmul %410, %257, %cst_73 {dimension_numbers = #tpu.dot_dimension_numbers<[1], [0], [0], [1], [0, 0, 1, 1], [], []>} : vector<2x32xf32>, vector<32x96xf32>, vector<2x96xf32> -> vector<2x96xf32>
    %413 = vector.extract_strided_slice %411 {offsets = [0, 0], sizes = [2, 32], strides = [1, 1]} : vector<2x96xf32> to vector<2x32xf32>
    %414 = vector.extract_strided_slice %412 {offsets = [0, 0], sizes = [2, 32], strides = [1, 1]} : vector<2x96xf32> to vector<2x32xf32>
    %415 = arith.addf %413, %414 : vector<2x32xf32>
    %416 = arith.negf %415 : vector<2x32xf32>
    %417 = math.exp %416 : vector<2x32xf32>
    %cst_74 = arith.constant 1.000000e+00 : f32
    %418 = vector.broadcast %cst_74 : f32 to vector<2x32xf32>
    %419 = arith.addf %418, %417 : vector<2x32xf32>
    %420 = arith.divf %418, %419 : vector<2x32xf32>
    %421 = vector.extract_strided_slice %411 {offsets = [0, 32], sizes = [2, 32], strides = [1, 1]} : vector<2x96xf32> to vector<2x32xf32>
    %422 = vector.extract_strided_slice %412 {offsets = [0, 32], sizes = [2, 32], strides = [1, 1]} : vector<2x96xf32> to vector<2x32xf32>
    %423 = arith.addf %421, %422 : vector<2x32xf32>
    %424 = arith.negf %423 : vector<2x32xf32>
    %425 = math.exp %424 : vector<2x32xf32>
    %cst_75 = arith.constant 1.000000e+00 : f32
    %426 = vector.broadcast %cst_75 : f32 to vector<2x32xf32>
    %427 = arith.addf %426, %425 : vector<2x32xf32>
    %428 = arith.divf %426, %427 : vector<2x32xf32>
    %429 = vector.extract_strided_slice %411 {offsets = [0, 64], sizes = [2, 32], strides = [1, 1]} : vector<2x96xf32> to vector<2x32xf32>
    %430 = vector.extract_strided_slice %412 {offsets = [0, 64], sizes = [2, 32], strides = [1, 1]} : vector<2x96xf32> to vector<2x32xf32>
    %431 = vector.broadcast %258 : vector<1x32xf32> to vector<2x32xf32>
    %432 = arith.addf %430, %431 : vector<2x32xf32>
    %433 = arith.mulf %420, %432 : vector<2x32xf32>
    %434 = arith.addf %429, %433 : vector<2x32xf32>
    %435 = math.tanh %434 : vector<2x32xf32>
    %cst_76 = arith.constant 1.000000e+00 : f32
    %436 = vector.broadcast %cst_76 : f32 to vector<2x32xf32>
    %437 = arith.subf %436, %428 : vector<2x32xf32>
    %438 = arith.mulf %437, %435 : vector<2x32xf32>
    %439 = arith.mulf %428, %410 : vector<2x32xf32>
    %440 = arith.addf %438, %439 : vector<2x32xf32>
    %441 = vector.extract_strided_slice %256 {offsets = [12, 0], sizes = [2, 96], strides = [1, 1]} : vector<16x96xf32> to vector<2x96xf32>
    %cst_77 = arith.constant dense<0.000000e+00> : vector<2x96xf32>
    %442 = tpu.matmul %440, %257, %cst_77 {dimension_numbers = #tpu.dot_dimension_numbers<[1], [0], [0], [1], [0, 0, 1, 1], [], []>} : vector<2x32xf32>, vector<32x96xf32>, vector<2x96xf32> -> vector<2x96xf32>
    %443 = vector.extract_strided_slice %441 {offsets = [0, 0], sizes = [2, 32], strides = [1, 1]} : vector<2x96xf32> to vector<2x32xf32>
    %444 = vector.extract_strided_slice %442 {offsets = [0, 0], sizes = [2, 32], strides = [1, 1]} : vector<2x96xf32> to vector<2x32xf32>
    %445 = arith.addf %443, %444 : vector<2x32xf32>
    %446 = arith.negf %445 : vector<2x32xf32>
    %447 = math.exp %446 : vector<2x32xf32>
    %cst_78 = arith.constant 1.000000e+00 : f32
    %448 = vector.broadcast %cst_78 : f32 to vector<2x32xf32>
    %449 = arith.addf %448, %447 : vector<2x32xf32>
    %450 = arith.divf %448, %449 : vector<2x32xf32>
    %451 = vector.extract_strided_slice %441 {offsets = [0, 32], sizes = [2, 32], strides = [1, 1]} : vector<2x96xf32> to vector<2x32xf32>
    %452 = vector.extract_strided_slice %442 {offsets = [0, 32], sizes = [2, 32], strides = [1, 1]} : vector<2x96xf32> to vector<2x32xf32>
    %453 = arith.addf %451, %452 : vector<2x32xf32>
    %454 = arith.negf %453 : vector<2x32xf32>
    %455 = math.exp %454 : vector<2x32xf32>
    %cst_79 = arith.constant 1.000000e+00 : f32
    %456 = vector.broadcast %cst_79 : f32 to vector<2x32xf32>
    %457 = arith.addf %456, %455 : vector<2x32xf32>
    %458 = arith.divf %456, %457 : vector<2x32xf32>
    %459 = vector.extract_strided_slice %441 {offsets = [0, 64], sizes = [2, 32], strides = [1, 1]} : vector<2x96xf32> to vector<2x32xf32>
    %460 = vector.extract_strided_slice %442 {offsets = [0, 64], sizes = [2, 32], strides = [1, 1]} : vector<2x96xf32> to vector<2x32xf32>
    %461 = vector.broadcast %258 : vector<1x32xf32> to vector<2x32xf32>
    %462 = arith.addf %460, %461 : vector<2x32xf32>
    %463 = arith.mulf %450, %462 : vector<2x32xf32>
    %464 = arith.addf %459, %463 : vector<2x32xf32>
    %465 = math.tanh %464 : vector<2x32xf32>
    %cst_80 = arith.constant 1.000000e+00 : f32
    %466 = vector.broadcast %cst_80 : f32 to vector<2x32xf32>
    %467 = arith.subf %466, %458 : vector<2x32xf32>
    %468 = arith.mulf %467, %465 : vector<2x32xf32>
    %469 = arith.mulf %458, %440 : vector<2x32xf32>
    %470 = arith.addf %468, %469 : vector<2x32xf32>
    %471 = vector.extract_strided_slice %256 {offsets = [14, 0], sizes = [2, 96], strides = [1, 1]} : vector<16x96xf32> to vector<2x96xf32>
    %cst_81 = arith.constant dense<0.000000e+00> : vector<2x96xf32>
    %472 = tpu.matmul %470, %257, %cst_81 {dimension_numbers = #tpu.dot_dimension_numbers<[1], [0], [0], [1], [0, 0, 1, 1], [], []>} : vector<2x32xf32>, vector<32x96xf32>, vector<2x96xf32> -> vector<2x96xf32>
    %473 = vector.extract_strided_slice %471 {offsets = [0, 0], sizes = [2, 32], strides = [1, 1]} : vector<2x96xf32> to vector<2x32xf32>
    %474 = vector.extract_strided_slice %472 {offsets = [0, 0], sizes = [2, 32], strides = [1, 1]} : vector<2x96xf32> to vector<2x32xf32>
    %475 = arith.addf %473, %474 : vector<2x32xf32>
    %476 = arith.negf %475 : vector<2x32xf32>
    %477 = math.exp %476 : vector<2x32xf32>
    %cst_82 = arith.constant 1.000000e+00 : f32
    %478 = vector.broadcast %cst_82 : f32 to vector<2x32xf32>
    %479 = arith.addf %478, %477 : vector<2x32xf32>
    %480 = arith.divf %478, %479 : vector<2x32xf32>
    %481 = vector.extract_strided_slice %471 {offsets = [0, 32], sizes = [2, 32], strides = [1, 1]} : vector<2x96xf32> to vector<2x32xf32>
    %482 = vector.extract_strided_slice %472 {offsets = [0, 32], sizes = [2, 32], strides = [1, 1]} : vector<2x96xf32> to vector<2x32xf32>
    %483 = arith.addf %481, %482 : vector<2x32xf32>
    %484 = arith.negf %483 : vector<2x32xf32>
    %485 = math.exp %484 : vector<2x32xf32>
    %cst_83 = arith.constant 1.000000e+00 : f32
    %486 = vector.broadcast %cst_83 : f32 to vector<2x32xf32>
    %487 = arith.addf %486, %485 : vector<2x32xf32>
    %488 = arith.divf %486, %487 : vector<2x32xf32>
    %489 = vector.extract_strided_slice %471 {offsets = [0, 64], sizes = [2, 32], strides = [1, 1]} : vector<2x96xf32> to vector<2x32xf32>
    %490 = vector.extract_strided_slice %472 {offsets = [0, 64], sizes = [2, 32], strides = [1, 1]} : vector<2x96xf32> to vector<2x32xf32>
    %491 = vector.broadcast %258 : vector<1x32xf32> to vector<2x32xf32>
    %492 = arith.addf %490, %491 : vector<2x32xf32>
    %493 = arith.mulf %480, %492 : vector<2x32xf32>
    %494 = arith.addf %489, %493 : vector<2x32xf32>
    %495 = math.tanh %494 : vector<2x32xf32>
    %cst_84 = arith.constant 1.000000e+00 : f32
    %496 = vector.broadcast %cst_84 : f32 to vector<2x32xf32>
    %497 = arith.subf %496, %488 : vector<2x32xf32>
    %498 = arith.mulf %497, %495 : vector<2x32xf32>
    %499 = arith.mulf %488, %470 : vector<2x32xf32>
    %500 = arith.addf %498, %499 : vector<2x32xf32>
    %501 = tpu.concatenate %290, %320, %350, %380, %410, %440, %470, %500 in 0 : vector<2x32xf32>, vector<2x32xf32>, vector<2x32xf32>, vector<2x32xf32>, vector<2x32xf32>, vector<2x32xf32>, vector<2x32xf32>, vector<2x32xf32> -> vector<16x32xf32>
    %c0_85 = arith.constant 0 : index
    %c0_86 = arith.constant 0 : index
    %c0_87 = arith.constant 0 : index
    %502 = vector.load %arg13[%c0_85, %c0_86, %c0_87] : memref<2x2x32xf32, #tpu.memory_space<vmem>>, vector<1x2x32xf32>
    %503 = vector.shape_cast %502 : vector<1x2x32xf32> to vector<2x32xf32>
    %504 = vector.shape_cast %250 : vector<2x32xf32> to vector<1x2x32xf32>
    tpu.vector_store %arg13[%c0_85, %c0_86, %c0_87], %504 {strides = array<i32>} : memref<2x2x32xf32, #tpu.memory_space<vmem>>, vector<1x2x32xf32>,
    %c1 = arith.constant 1 : index
    %c0_88 = arith.constant 0 : index
    %c0_89 = arith.constant 0 : index
    %505 = vector.load %arg13[%c1, %c0_88, %c0_89] : memref<2x2x32xf32, #tpu.memory_space<vmem>>, vector<1x2x32xf32>
    %506 = vector.shape_cast %505 : vector<1x2x32xf32> to vector<2x32xf32>
    %507 = vector.shape_cast %500 : vector<2x32xf32> to vector<1x2x32xf32>
    tpu.vector_store %arg13[%c1, %c0_88, %c0_89], %507 {strides = array<i32>} : memref<2x2x32xf32, #tpu.memory_space<vmem>>, vector<1x2x32xf32>,
    %cst_90 = arith.constant 0.000000e+00 : f32
    %508 = vector.broadcast %cst_90 : f32 to vector<16x32xf32>
    %509 = arith.maximumf %501, %508 : vector<16x32xf32>
    %c0_91 = arith.constant 0 : index
    %c0_92 = arith.constant 0 : index
    %510 = vector.load %arg10[%c0_91, %c0_92] : memref<32x10xf32, #tpu.memory_space<vmem>>, vector<32x10xf32>
    %cst_93 = arith.constant dense<0.000000e+00> : vector<16x10xf32>
    %511 = tpu.matmul %509, %510, %cst_93 {dimension_numbers = #tpu.dot_dimension_numbers<[1], [0], [0], [1], [0, 0, 1, 1], [], []>} : vector<16x32xf32>, vector<32x10xf32>, vector<16x10xf32> -> vector<16x10xf32>
    %c0_94 = arith.constant 0 : index
    %c0_95 = arith.constant 0 : index
    %512 = vector.load %arg11[%c0_94, %c0_95] : memref<1x10xf32, #tpu.memory_space<vmem>>, vector<1x10xf32>
    %513 = vector.broadcast %512 : vector<1x10xf32> to vector<16x10xf32>
    %514 = arith.addf %511, %513 : vector<16x10xf32>
    %c0_96 = arith.constant 0 : index
    %c0_97 = arith.constant 0 : index
    %515 = vector.load %arg12[%c0_96, %c0_97] : memref<16x10xf32, #tpu.memory_space<vmem>>, vector<16x10xf32>
    tpu.vector_store %arg12[%c0_96, %c0_97], %514 {strides = array<i32>} : memref<16x10xf32, #tpu.memory_space<vmem>>, vector<16x10xf32>,
    return
  }
}

</mosaic_0001>

<llo_original>
// kernel: tpu_custom_call.1
$region0: #{tpu_custom_call.1}
  #allocation0 [shape = 'u32[]', space=smem, size = 0x4, offset = 0x4, fixed_abs, tag = 'smem constant byte address 0x4 - core index']
  #allocation1 [shape = 'u32[72,128]{1,0:T(1,128)}', space=vmem, size = 0x9000, scoped, tag = 'internal scratch']
  %s0 = inlined_call_operand.vmem [shape: f32[16,16], index: 0, kind: input, shape index: {}]
  %s1 = inlined_call_operand.hbm [shape: f32[2,2,32], index: 1, kind: input, shape index: {}]
  %s2 = inlined_call_operand.hbm [shape: f32[16,96], index: 2, kind: input, shape index: {}]
  %s3 = inlined_call_operand.vmem [shape: f32[32,96], index: 3, kind: input, shape index: {}]
  %s4 = inlined_call_operand.vmem [shape: f32[1,96], index: 4, kind: input, shape index: {}]
  %s5 = inlined_call_operand.vmem [shape: f32[1,32], index: 5, kind: input, shape index: {}]
  %s6 = inlined_call_operand.hbm [shape: f32[32,96], index: 6, kind: input, shape index: {}]
  %s7 = inlined_call_operand.hbm [shape: f32[32,96], index: 7, kind: input, shape index: {}]
  %s8 = inlined_call_operand.vmem [shape: f32[1,96], index: 8, kind: input, shape index: {}]
  %s9 = inlined_call_operand.vmem [shape: f32[1,32], index: 9, kind: input, shape index: {}]
  %s10 = inlined_call_operand.vmem [shape: f32[32,10], index: 10, kind: input, shape index: {}]
  %s11 = inlined_call_operand.vmem [shape: f32[1,10], index: 11, kind: input, shape index: {}]
  %s12 = inlined_call_operand.hbm [shape: f32[16,10], index: 12, kind: output, shape index: {0}]
  %s13 = inlined_call_operand.hbm [shape: f32[2,2,32], index: 13, kind: output, shape index: {1}]
  %14 = xla_tuple %s12, %s13
  %s15 = sld [smem:[#allocation0]]
  $region82: #{tpu_custom_call.1} parent=0
    _
  %s17 = ssub.s32 1, %s15
  %s18 = scalar_select 0, %s17, %s15
  $region1: #{tpu_custom_call.1} parent=0
    #allocation2 [shape = 'u8[2048]{0}', space=vmem, size = 0x800, scoped, tag = 'input window, operand 1, single buffered']
    #allocation3 [shape = 's32[1]{0}', space=sflag, size = 0x4, scoped, tag = 'scoped memory for tpu_custom_call.1']
    #allocation4 [shape = 's32[1]{0}', space=sflag, size = 0x4, scoped, tag = 'scoped memory for tpu_custom_call.1']
    #allocation5 [shape = 'u8[8192]{0}', space=vmem, size = 0x2000, scoped, tag = 'input window, operand 2, single buffered']
    #allocation6 [shape = 's32[1]{0}', space=sflag, size = 0x4, scoped, tag = 'scoped memory for tpu_custom_call.1']
    #allocation7 [shape = 'u8[16384]{0}', space=vmem, size = 0x4000, scoped, tag = 'input window, operand 6, single buffered']
    #allocation8 [shape = 'u8[16384]{0}', space=vmem, size = 0x4000, scoped, tag = 'input window, operand 7, single buffered']
    #allocation9 [shape = 's32[1]{0}', space=sflag, size = 0x4, scoped, tag = 'scoped memory for tpu_custom_call.1']
    #allocation10 [shape = 'u8[8192]{0}', space=vmem, size = 0x2000, scoped, tag = 'output window, operand 0, single buffered']
    #allocation11 [shape = 'u8[2048]{0}', space=vmem, size = 0x800, scoped, tag = 'output window, operand 1, single buffered']
    #allocation12 [shape = 's32[1]{0}', space=sflag, size = 0x4, scoped, tag = 'scoped memory for tpu_custom_call.1']
    %19 = vsyncpa [#allocation3], 0
    %20 = vsyncpa [#allocation6], 0
    %21 = vsyncpa [#allocation9], 0
    %22 = vsyncpa [#allocation4], 0
    %23 = vsyncpa [#allocation12], 0
    // Predicated region
    $region2: #{tpu_custom_call.1} parent=1 // pred_check
      _
    $region3: #{tpu_custom_call.1} parent=1 // pred_check_branch
      %25 = sbr.rel (0) target = $region5
    $region4: #{tpu_custom_call.1} parent=1 // pred_region
      _
    $region5: #{tpu_custom_call.1} parent=1 // pred_fallthru
      _
    // Predicated region
    $region6: #{tpu_custom_call.1} parent=1 // pred_check
      _
    $region7: #{tpu_custom_call.1} parent=1 // pred_check_branch
      %27 = sbr.rel (0) target = $region9
    $region8: #{tpu_custom_call.1} parent=1 // pred_region
      %29 = vsyncadd [#allocation3], 0
      %s30 = sshll.u32 %s1, 4
      %s31 = int_to_ptr.hbm [resolvable:$true] %s30
      %s32 = sshll.u32 [#allocation2], 4
      %s33 = int_to_ptr.vmem [resolvable:$true] %s32
      %38 = dma.hbm_to_vmem [thread:$0]  %s31, 64, %s33, [#allocation3], 32, 32, 2
    $region9: #{tpu_custom_call.1} parent=1 // pred_fallthru
      _
    // Predicated region
    $region10: #{tpu_custom_call.1} parent=1 // pred_check
      _
    $region11: #{tpu_custom_call.1} parent=1 // pred_check_branch
      %40 = sbr.rel (0) target = $region13
    $region12: #{tpu_custom_call.1} parent=1 // pred_region
      %42 = vsyncadd [#allocation6], 0
      %s43 = sshll.u32 %s2, 4
      %s44 = int_to_ptr.hbm [resolvable:$true] %s43
      %s45 = sshll.u32 [#allocation5], 4
      %s46 = int_to_ptr.vmem [resolvable:$true] %s45
      %51 = dma.hbm_to_vmem [thread:$0]  %s44, 256, %s46, [#allocation6], 128, 128, 8
    $region13: #{tpu_custom_call.1} parent=1 // pred_fallthru
      _
    // Predicated region
    $region14: #{tpu_custom_call.1} parent=1 // pred_check
      _
    $region15: #{tpu_custom_call.1} parent=1 // pred_check_branch
      %53 = sbr.rel (0) target = $region17
    $region16: #{tpu_custom_call.1} parent=1 // pred_region
      _
    $region17: #{tpu_custom_call.1} parent=1 // pred_fallthru
      _
    // Predicated region
    $region18: #{tpu_custom_call.1} parent=1 // pred_check
      _
    $region19: #{tpu_custom_call.1} parent=1 // pred_check_branch
      %55 = sbr.rel (0) target = $region21
    $region20: #{tpu_custom_call.1} parent=1 // pred_region
      _
    $region21: #{tpu_custom_call.1} parent=1 // pred_fallthru
      _
    // Predicated region
    $region22: #{tpu_custom_call.1} parent=1 // pred_check
      _
    $region23: #{tpu_custom_call.1} parent=1 // pred_check_branch
      %57 = sbr.rel (0) target = $region25
    $region24: #{tpu_custom_call.1} parent=1 // pred_region
      _
    $region25: #{tpu_custom_call.1} parent=1 // pred_fallthru
      _
    // Predicated region
    $region26: #{tpu_custom_call.1} parent=1 // pred_check
      _
    $region27: #{tpu_custom_call.1} parent=1 // pred_check_branch
      %59 = sbr.rel (0) target = $region29
    $region28: #{tpu_custom_call.1} parent=1 // pred_region
      %61 = vsyncadd [#allocation6], 0
      %s62 = sshll.u32 %s6, 4
      %s63 = int_to_ptr.hbm [resolvable:$true] %s62
      %s64 = sshll.u32 [#allocation7], 4
      %s65 = int_to_ptr.vmem [resolvable:$true] %s64
      %70 = dma.hbm_to_vmem [thread:$0]  %s63, 512, %s65, [#allocation6], 128, 128, 8
    $region29: #{tpu_custom_call.1} parent=1 // pred_fallthru
      _
    // Predicated region
    $region30: #{tpu_custom_call.1} parent=1 // pred_check
      _
    $region31: #{tpu_custom_call.1} parent=1 // pred_check_branch
      %72 = sbr.rel (0) target = $region33
    $region32: #{tpu_custom_call.1} parent=1 // pred_region
      %74 = vsyncadd [#allocation9], 0
      %s75 = sshll.u32 %s7, 4
      %s76 = int_to_ptr.hbm [resolvable:$true] %s75
      %s77 = sshll.u32 [#allocation8], 4
      %s78 = int_to_ptr.vmem [resolvable:$true] %s77
      %83 = dma.hbm_to_vmem [thread:$0]  %s76, 512, %s78, [#allocation9], 128, 128, 8
    $region33: #{tpu_custom_call.1} parent=1 // pred_fallthru
      _
    // Predicated region
    $region34: #{tpu_custom_call.1} parent=1 // pred_check
      _
    $region35: #{tpu_custom_call.1} parent=1 // pred_check_branch
      %85 = sbr.rel (0) target = $region37
    $region36: #{tpu_custom_call.1} parent=1 // pred_region
      _
    $region37: #{tpu_custom_call.1} parent=1 // pred_fallthru
      _
    // Predicated region
    $region38: #{tpu_custom_call.1} parent=1 // pred_check
      _
    $region39: #{tpu_custom_call.1} parent=1 // pred_check_branch
      %87 = sbr.rel (0) target = $region41
    $region40: #{tpu_custom_call.1} parent=1 // pred_region
      _
    $region41: #{tpu_custom_call.1} parent=1 // pred_fallthru
      _
    // Predicated region
    $region42: #{tpu_custom_call.1} parent=1 // pred_check
      _
    $region43: #{tpu_custom_call.1} parent=1 // pred_check_branch
      %89 = sbr.rel (0) target = $region45
    $region44: #{tpu_custom_call.1} parent=1 // pred_region
      _
    $region45: #{tpu_custom_call.1} parent=1 // pred_fallthru
      _
    // Predicated region
    $region46: #{tpu_custom_call.1} parent=1 // pred_check
      _
    $region47: #{tpu_custom_call.1} parent=1 // pred_check_branch
      %91 = sbr.rel (0) target = $region49
    $region48: #{tpu_custom_call.1} parent=1 // pred_region
      _
    $region49: #{tpu_custom_call.1} parent=1 // pred_fallthru
      _
    // Predicated region
    $region50: #{tpu_custom_call.1} parent=1 // pred_check
      _
    $region51: #{tpu_custom_call.1} parent=1 // pred_check_branch
      %93 = sbr.rel (0) target = $region53
    $region52: #{tpu_custom_call.1} parent=1 // pred_region
      %95 = dma.done [#allocation3], 64
    $region53: #{tpu_custom_call.1} parent=1 // pred_fallthru
      _
    // Predicated region
    $region54: #{tpu_custom_call.1} parent=1 // pred_check
      _
    $region55: #{tpu_custom_call.1} parent=1 // pred_check_branch
      %97 = sbr.rel (0) target = $region57
    $region56: #{tpu_custom_call.1} parent=1 // pred_region
      %99 = dma.done [#allocation6], 256
    $region57: #{tpu_custom_call.1} parent=1 // pred_fallthru
      _
    // Predicated region
    $region58: #{tpu_custom_call.1} parent=1 // pred_check
      _
    $region59: #{tpu_custom_call.1} parent=1 // pred_check_branch
      %101 = sbr.rel (0) target = $region61
    $region60: #{tpu_custom_call.1} parent=1 // pred_region
      %103 = dma.done [#allocation6], 512
    $region61: #{tpu_custom_call.1} parent=1 // pred_fallthru
      _
    // Predicated region
    $region62: #{tpu_custom_call.1} parent=1 // pred_check
      _
    $region63: #{tpu_custom_call.1} parent=1 // pred_check_branch
      %105 = sbr.rel (0) target = $region65
    $region64: #{tpu_custom_call.1} parent=1 // pred_region
      %107 = dma.done [#allocation9], 512
    $region65: #{tpu_custom_call.1} parent=1 // pred_fallthru
      _
    %v108 = vld [vmem:[%s0] sm:$0xff]
    %v109 = vld [vmem:[%s0 + $0x8] sm:$0xff]
    %v110 = vld [vmem:[#allocation2] sm:$0x3]
    %v111 = vld [vmem:[#allocation2 + $0x2] sm:$0x3]
    %v112 = vld [vmem:[#allocation5] sm:$0xff]
    %v113 = vld [vmem:[#allocation5 + $0x8] sm:$0xff]
    %v114 = vld [vmem:[%s4] sm:$0x1]
    %v116 = vperm.slane %v114, 0
    %vm118 = vcmask 130048
    %v120 = vsel %vm118, %v108, 0
    %v123 = vsel %vm118, %v109, 0
    %125 = vmatpush.msra.mxu0 0.0
    %126 = vmatpush.msra.mxu0 0.0
    %127 = vmatpush.msra.mxu0 0.0
    %128 = vmatpush.msra.mxu0 0.0
    %129 = vmatpush.msra.mxu0 0.0
    %130 = vmatpush.msra.mxu0 0.0
    %131 = vmatpush.msra.mxu0 0.0
    %132 = vmatpush.msra.mxu0 0.0
    %133 = vmatpush.msra.mxu0 0.0
    %134 = vmatpush.msra.mxu0 0.0
    %135 = vmatpush.msra.mxu0 0.0
    %136 = vmatpush.msra.mxu0 0.0
    %137 = vmatpush.msra.mxu0 0.0
    %138 = vmatpush.msra.mxu0 0.0
    %139 = vmatpush.msra.mxu0 %v113
    %140 = vmatpush.msra.mxu0 %v112
    %141 = vmatmul.f32.gmra.mxu0 %v120
    %v142 = vpop.f32.mrf.mxu0
    %v143 = vadd.f32 %v116, %v142
    %144 = vmatmul.f32.gmra.mxu0 %v123
    %v145 = vpop.f32.mrf.mxu0
    %v146 = vadd.f32 %v116, %v145
    %147 = vdwg.mxu0
    %v148 = vld [vmem:[%s3] sm:$0xff]
    %v149 = vld [vmem:[%s3 + $0x8] sm:$0xff]
    %v150 = vld [vmem:[%s3 + $0x10] sm:$0xff]
    %v151 = vld [vmem:[%s3 + $0x18] sm:$0xff]
    %v152 = vld [vmem:[%s5] sm:$0x1]
    %vm153 = vcmask 261120
    %v155 = vsel %vm153, %v110, 0
    %157 = vmatpush.msra.mxu0 0.0
    %158 = vmatpush.msra.mxu0 0.0
    %159 = vmatpush.msra.mxu0 0.0
    %160 = vmatpush.msra.mxu0 0.0
    %161 = vmatpush.msra.mxu0 0.0
    %162 = vmatpush.msra.mxu0 0.0
    %163 = vmatpush.msra.mxu0 0.0
    %164 = vmatpush.msra.mxu0 0.0
    %165 = vmatpush.msra.mxu0 0.0
    %166 = vmatpush.msra.mxu0 0.0
    %167 = vmatpush.msra.mxu0 0.0
    %168 = vmatpush.msra.mxu0 0.0
    %169 = vmatpush.msra.mxu0 %v151
    %170 = vmatpush.msra.mxu0 %v150
    %171 = vmatpush.msra.mxu0 %v149
    %172 = vmatpush.msra.mxu0 %v148
    %173 = vmatmul.f32.gmra.mxu0 %v155
    %v174 = vpop.f32.mrf.mxu0
    %v175 = vadd.f32 0.0, %v174
    %176 = vdwg.mxu0
    %v177 = vadd.f32 %v143, %v175
    %v178 = vxor.u32 %v177, 2147483648
    %v179 = vmul.f32 %v178, 1.442695
    %v180 = vpow.pop %v179
    %v181 = vadd.f32 %v180, 1.0
    %v182 = vrcp.pop %v181
    %v183 = vmul.f32 %v181, %v182
    %v184 = vsub.f32 1.0, %v183
    %v185 = vmul.f32 %v182, %v184
    %v186 = vadd.f32 %v182, %v185
    %vm187 = vweird.f32 %v181
    %vm188 = vweird.f32 %v182
    %vm189 = vmor %vm187, %vm188
    %v190 = vsel %vm189, %v182, %v186
    %v191 = vand.u32 2147483647, %v181
    %vm192 = vcmp.eq.f32.partialorder %v191, 8.507059e+37
    %v193 = vand.u32 %v181, 2147483648
    %v194 = vor.u32 1.1754944e-38, %v193
    %v195 = vsel %vm192, %v194, %v190
    %v196 = vmul.f32 1.0, %v195
    %v198 = vperm.slane %v152, 0
    %199 = vrot.lane.b32.xlu0 %v198, 64
    %v200 = vpop.permute.xlu0 %199
    %v202 = vadd.f32 %v175, %v200
    %204 = vrot.lane.b32.xlu0 %v202, 64
    %v205 = vpop.permute.xlu0 %204
    %v207 = vmul.f32 %v196, %v205
    %209 = vrot.lane.b32.xlu0 %v207, 64
    %v210 = vpop.permute.xlu0 %209
    %v212 = vadd.f32 %v143, %v210
    %v213 = vtanh.pop %v212
    %v214 = vsub.f32 1.0, %v196
    %216 = vrot.lane.b32.xlu0 %v213, 96
    %v217 = vpop.permute.xlu0 %216
    %v219 = vmul.f32 %v214, %v217
    %220 = vrot.lane.b32.xlu0 %v110, 32
    %v221 = vpop.permute.xlu0 %220
    %v223 = vmul.f32 %v196, %v221
    %v224 = vadd.f32 %v219, %v223
    %226 = vrot.lane.b32.xlu0 %v224, 96
    %v227 = vpop.permute.xlu0 %226
    %v228 = vsel %vm153, %v227, 0
    %230 = vmatpush.msra.mxu0 0.0
    %231 = vmatpush.msra.mxu0 0.0
    %232 = vmatpush.msra.mxu0 0.0
    %233 = vmatpush.msra.mxu0 0.0
    %234 = vmatpush.msra.mxu0 0.0
    %235 = vmatpush.msra.mxu0 0.0
    %236 = vmatpush.msra.mxu0 0.0
    %237 = vmatpush.msra.mxu0 0.0
    %238 = vmatpush.msra.mxu0 0.0
    %239 = vmatpush.msra.mxu0 0.0
    %240 = vmatpush.msra.mxu0 0.0
    %241 = vmatpush.msra.mxu0 0.0
    %242 = vmatpush.msra.mxu0 %v151
    %243 = vmatpush.msra.mxu0 %v150
    %244 = vmatpush.msra.mxu0 %v149
    %245 = vmatpush.msra.mxu0 %v148
    %246 = vmatmul.f32.gmra.mxu0 %v228
    %v247 = vpop.f32.mrf.mxu0
    %v248 = vadd.f32 0.0, %v247
    %249 = vdwg.mxu0
    %v251 = vrot.slane %v248, 6
    %v253 = vadd.f32 %v143, %v251
    %v254 = vxor.u32 %v253, 2147483648
    %v255 = vmul.f32 %v254, 1.442695
    %v256 = vpow.pop %v255
    %v257 = vadd.f32 %v256, 1.0
    %v258 = vrcp.pop %v257
    %v259 = vmul.f32 %v257, %v258
    %v260 = vsub.f32 1.0, %v259
    %v261 = vmul.f32 %v258, %v260
    %v262 = vadd.f32 %v258, %v261
    %vm263 = vweird.f32 %v257
    %vm264 = vweird.f32 %v258
    %vm265 = vmor %vm263, %vm264
    %v266 = vsel %vm265, %v258, %v262
    %v267 = vand.u32 2147483647, %v257
    %vm268 = vcmp.eq.f32.partialorder %v267, 8.507059e+37
    %v269 = vand.u32 %v257, 2147483648
    %v270 = vor.u32 1.1754944e-38, %v269
    %v271 = vsel %vm268, %v270, %v266
    %v272 = vmul.f32 1.0, %v271
    %v273 = vadd.f32 %v248, %v200
    %v275 = vrot.slane %v273, 6
    %276 = vrot.lane.b32.xlu0 %v275, 64
    %v277 = vpop.permute.xlu0 %276
    %v279 = vmul.f32 %v272, %v277
    %281 = vrot.lane.b32.xlu0 %v279, 64
    %v282 = vpop.permute.xlu0 %281
    %v284 = vadd.f32 %v143, %v282
    %v285 = vtanh.pop %v284
    %v286 = vsub.f32 1.0, %v272
    %288 = vrot.lane.b32.xlu0 %v285, 96
    %v289 = vpop.permute.xlu0 %288
    %v291 = vmul.f32 %v286, %v289
    %v292 = vrot.slane %v224, 6
    %v294 = vmul.f32 %v272, %v292
    %v295 = vadd.f32 %v291, %v294
    %v297 = vrot.slane %v295, 2
    %298 = vrot.lane.b32.xlu0 %v297, 96
    %v299 = vpop.permute.xlu0 %298
    %v300 = vsel %vm153, %v299, 0
    %302 = vmatpush.msra.mxu0 0.0
    %303 = vmatpush.msra.mxu0 0.0
    %304 = vmatpush.msra.mxu0 0.0
    %305 = vmatpush.msra.mxu0 0.0
    %306 = vmatpush.msra.mxu0 0.0
    %307 = vmatpush.msra.mxu0 0.0
    %308 = vmatpush.msra.mxu0 0.0
    %309 = vmatpush.msra.mxu0 0.0
    %310 = vmatpush.msra.mxu0 0.0
    %311 = vmatpush.msra.mxu0 0.0
    %312 = vmatpush.msra.mxu0 0.0
    %313 = vmatpush.msra.mxu0 0.0
    %314 = vmatpush.msra.mxu0 %v151
    %315 = vmatpush.msra.mxu0 %v150
    %316 = vmatpush.msra.mxu0 %v149
    %317 = vmatpush.msra.mxu0 %v148
    %318 = vmatmul.f32.gmra.mxu0 %v300
    %v319 = vpop.f32.mrf.mxu0
    %v320 = vadd.f32 0.0, %v319
    %321 = vdwg.mxu0
    %v323 = vrot.slane %v320, 4
    %v325 = vadd.f32 %v143, %v323
    %v326 = vxor.u32 %v325, 2147483648
    %v327 = vmul.f32 %v326, 1.442695
    %v328 = vpow.pop %v327
    %v329 = vadd.f32 %v328, 1.0
    %v330 = vrcp.pop %v329
    %v331 = vmul.f32 %v329, %v330
    %v332 = vsub.f32 1.0, %v331
    %v333 = vmul.f32 %v330, %v332
    %v334 = vadd.f32 %v330, %v333
    %vm335 = vweird.f32 %v329
    %vm336 = vweird.f32 %v330
    %vm337 = vmor %vm335, %vm336
    %v338 = vsel %vm337, %v330, %v334
    %v339 = vand.u32 2147483647, %v329
    %vm340 = vcmp.eq.f32.partialorder %v339, 8.507059e+37
    %v341 = vand.u32 %v329, 2147483648
    %v342 = vor.u32 1.1754944e-38, %v341
    %v343 = vsel %vm340, %v342, %v338
    %v344 = vmul.f32 1.0, %v343
    %v345 = vadd.f32 %v320, %v200
    %v347 = vrot.slane %v345, 4
    %348 = vrot.lane.b32.xlu0 %v347, 64
    %v349 = vpop.permute.xlu0 %348
    %v351 = vmul.f32 %v344, %v349
    %353 = vrot.lane.b32.xlu0 %v351, 64
    %v354 = vpop.permute.xlu0 %353
    %v356 = vadd.f32 %v143, %v354
    %v357 = vtanh.pop %v356
    %v358 = vsub.f32 1.0, %v344
    %360 = vrot.lane.b32.xlu0 %v357, 96
    %v361 = vpop.permute.xlu0 %360
    %v363 = vmul.f32 %v358, %v361
    %v364 = vrot.slane %v295, 6
    %v366 = vmul.f32 %v344, %v364
    %v367 = vadd.f32 %v363, %v366
    %v369 = vrot.slane %v367, 4
    %370 = vrot.lane.b32.xlu0 %v369, 96
    %v371 = vpop.permute.xlu0 %370
    %v372 = vsel %vm153, %v371, 0
    %374 = vmatpush.msra.mxu0 0.0
    %375 = vmatpush.msra.mxu0 0.0
    %376 = vmatpush.msra.mxu0 0.0
    %377 = vmatpush.msra.mxu0 0.0
    %378 = vmatpush.msra.mxu0 0.0
    %379 = vmatpush.msra.mxu0 0.0
    %380 = vmatpush.msra.mxu0 0.0
    %381 = vmatpush.msra.mxu0 0.0
    %382 = vmatpush.msra.mxu0 0.0
    %383 = vmatpush.msra.mxu0 0.0
    %384 = vmatpush.msra.mxu0 0.0
    %385 = vmatpush.msra.mxu0 0.0
    %386 = vmatpush.msra.mxu0 %v151
    %387 = vmatpush.msra.mxu0 %v150
    %388 = vmatpush.msra.mxu0 %v149
    %389 = vmatpush.msra.mxu0 %v148
    %390 = vmatmul.f32.gmra.mxu0 %v372
    %v391 = vpop.f32.mrf.mxu0
    %v392 = vadd.f32 0.0, %v391
    %393 = vdwg.mxu0
    %v395 = vrot.slane %v392, 2
    %v397 = vadd.f32 %v143, %v395
    %v398 = vxor.u32 %v397, 2147483648
    %v399 = vmul.f32 %v398, 1.442695
    %v400 = vpow.pop %v399
    %v401 = vadd.f32 %v400, 1.0
    %v402 = vrcp.pop %v401
    %v403 = vmul.f32 %v401, %v402
    %v404 = vsub.f32 1.0, %v403
    %v405 = vmul.f32 %v402, %v404
    %v406 = vadd.f32 %v402, %v405
    %vm407 = vweird.f32 %v401
    %vm408 = vweird.f32 %v402
    %vm409 = vmor %vm407, %vm408
    %v410 = vsel %vm409, %v402, %v406
    %v411 = vand.u32 2147483647, %v401
    %vm412 = vcmp.eq.f32.partialorder %v411, 8.507059e+37
    %v413 = vand.u32 %v401, 2147483648
    %v414 = vor.u32 1.1754944e-38, %v413
    %v415 = vsel %vm412, %v414, %v410
    %v416 = vmul.f32 1.0, %v415
    %v417 = vadd.f32 %v392, %v200
    %v419 = vrot.slane %v417, 2
    %420 = vrot.lane.b32.xlu0 %v419, 64
    %v421 = vpop.permute.xlu0 %420
    %v423 = vmul.f32 %v416, %v421
    %425 = vrot.lane.b32.xlu0 %v423, 64
    %v426 = vpop.permute.xlu0 %425
    %v428 = vadd.f32 %v143, %v426
    %v429 = vtanh.pop %v428
    %v430 = vsub.f32 1.0, %v416
    %432 = vrot.lane.b32.xlu0 %v429, 96
    %v433 = vpop.permute.xlu0 %432
    %v435 = vmul.f32 %v430, %v433
    %v436 = vrot.slane %v367, 6
    %v438 = vmul.f32 %v416, %v436
    %v439 = vadd.f32 %v435, %v438
    %v441 = vrot.slane %v439, 6
    %442 = vrot.lane.b32.xlu0 %v441, 96
    %v443 = vpop.permute.xlu0 %442
    %v444 = vsel %vm153, %v443, 0
    %446 = vmatpush.msra.mxu0 0.0
    %447 = vmatpush.msra.mxu0 0.0
    %448 = vmatpush.msra.mxu0 0.0
    %449 = vmatpush.msra.mxu0 0.0
    %450 = vmatpush.msra.mxu0 0.0
    %451 = vmatpush.msra.mxu0 0.0
    %452 = vmatpush.msra.mxu0 0.0
    %453 = vmatpush.msra.mxu0 0.0
    %454 = vmatpush.msra.mxu0 0.0
    %455 = vmatpush.msra.mxu0 0.0
    %456 = vmatpush.msra.mxu0 0.0
    %457 = vmatpush.msra.mxu0 0.0
    %458 = vmatpush.msra.mxu0 %v151
    %459 = vmatpush.msra.mxu0 %v150
    %460 = vmatpush.msra.mxu0 %v149
    %461 = vmatpush.msra.mxu0 %v148
    %462 = vmatmul.f32.gmra.mxu0 %v444
    %v463 = vpop.f32.mrf.mxu0
    %v464 = vadd.f32 0.0, %v463
    %465 = vdwg.mxu0
    %v466 = vadd.f32 %v146, %v464
    %v467 = vxor.u32 %v466, 2147483648
    %v468 = vmul.f32 %v467, 1.442695
    %v469 = vpow.pop %v468
    %v470 = vadd.f32 %v469, 1.0
    %v471 = vrcp.pop %v470
    %v472 = vmul.f32 %v470, %v471
    %v473 = vsub.f32 1.0, %v472
    %v474 = vmul.f32 %v471, %v473
    %v475 = vadd.f32 %v471, %v474
    %vm476 = vweird.f32 %v470
    %vm477 = vweird.f32 %v471
    %vm478 = vmor %vm476, %vm477
    %v479 = vsel %vm478, %v471, %v475
    %v480 = vand.u32 2147483647, %v470
    %vm481 = vcmp.eq.f32.partialorder %v480, 8.507059e+37
    %v482 = vand.u32 %v470, 2147483648
    %v483 = vor.u32 1.1754944e-38, %v482
    %v484 = vsel %vm481, %v483, %v479
    %v485 = vmul.f32 1.0, %v484
    %v486 = vadd.f32 %v464, %v200
    %488 = vrot.lane.b32.xlu0 %v486, 64
    %v489 = vpop.permute.xlu0 %488
    %v491 = vmul.f32 %v485, %v489
    %493 = vrot.lane.b32.xlu0 %v491, 64
    %v494 = vpop.permute.xlu0 %493
    %v496 = vadd.f32 %v146, %v494
    %v497 = vtanh.pop %v496
    %v498 = vsub.f32 1.0, %v485
    %500 = vrot.lane.b32.xlu0 %v497, 96
    %v501 = vpop.permute.xlu0 %500
    %v503 = vmul.f32 %v498, %v501
    %v505 = vmul.f32 %v485, %v441
    %v506 = vadd.f32 %v503, %v505
    %508 = vrot.lane.b32.xlu0 %v506, 96
    %v509 = vpop.permute.xlu0 %508
    %v510 = vsel %vm153, %v509, 0
    %512 = vmatpush.msra.mxu0 0.0
    %513 = vmatpush.msra.mxu0 0.0
    %514 = vmatpush.msra.mxu0 0.0
    %515 = vmatpush.msra.mxu0 0.0
    %516 = vmatpush.msra.mxu0 0.0
    %517 = vmatpush.msra.mxu0 0.0
    %518 = vmatpush.msra.mxu0 0.0
    %519 = vmatpush.msra.mxu0 0.0
    %520 = vmatpush.msra.mxu0 0.0
    %521 = vmatpush.msra.mxu0 0.0
    %522 = vmatpush.msra.mxu0 0.0
    %523 = vmatpush.msra.mxu0 0.0
    %524 = vmatpush.msra.mxu0 %v151
    %525 = vmatpush.msra.mxu0 %v150
    %526 = vmatpush.msra.mxu0 %v149
    %527 = vmatpush.msra.mxu0 %v148
    %528 = vmatmul.f32.gmra.mxu0 %v510
    %v529 = vpop.f32.mrf.mxu0
    %v530 = vadd.f32 0.0, %v529
    %531 = vdwg.mxu0
    %v533 = vrot.slane %v530, 6
    %v535 = vadd.f32 %v146, %v533
    %v536 = vxor.u32 %v535, 2147483648
    %v537 = vmul.f32 %v536, 1.442695
    %v538 = vpow.pop %v537
    %v539 = vadd.f32 %v538, 1.0
    %v540 = vrcp.pop %v539
    %v541 = vmul.f32 %v539, %v540
    %v542 = vsub.f32 1.0, %v541
    %v543 = vmul.f32 %v540, %v542
    %v544 = vadd.f32 %v540, %v543
    %vm545 = vweird.f32 %v539
    %vm546 = vweird.f32 %v540
    %vm547 = vmor %vm545, %vm546
    %v548 = vsel %vm547, %v540, %v544
    %v549 = vand.u32 2147483647, %v539
    %vm550 = vcmp.eq.f32.partialorder %v549, 8.507059e+37
    %v551 = vand.u32 %v539, 2147483648
    %v552 = vor.u32 1.1754944e-38, %v551
    %v553 = vsel %vm550, %v552, %v548
    %v554 = vmul.f32 1.0, %v553
    %v555 = vadd.f32 %v530, %v200
    %v557 = vrot.slane %v555, 6
    %558 = vrot.lane.b32.xlu0 %v557, 64
    %v559 = vpop.permute.xlu0 %558
    %v561 = vmul.f32 %v554, %v559
    %563 = vrot.lane.b32.xlu0 %v561, 64
    %v564 = vpop.permute.xlu0 %563
    %v566 = vadd.f32 %v146, %v564
    %v567 = vtanh.pop %v566
    %v568 = vsub.f32 1.0, %v554
    %570 = vrot.lane.b32.xlu0 %v567, 96
    %v571 = vpop.permute.xlu0 %570
    %v573 = vmul.f32 %v568, %v571
    %v574 = vrot.slane %v506, 6
    %v576 = vmul.f32 %v554, %v574
    %v577 = vadd.f32 %v573, %v576
    %v579 = vrot.slane %v577, 2
    %580 = vrot.lane.b32.xlu0 %v579, 96
    %v581 = vpop.permute.xlu0 %580
    %v582 = vsel %vm153, %v581, 0
    %584 = vmatpush.msra.mxu0 0.0
    %585 = vmatpush.msra.mxu0 0.0
    %586 = vmatpush.msra.mxu0 0.0
    %587 = vmatpush.msra.mxu0 0.0
    %588 = vmatpush.msra.mxu0 0.0
    %589 = vmatpush.msra.mxu0 0.0
    %590 = vmatpush.msra.mxu0 0.0
    %591 = vmatpush.msra.mxu0 0.0
    %592 = vmatpush.msra.mxu0 0.0
    %593 = vmatpush.msra.mxu0 0.0
    %594 = vmatpush.msra.mxu0 0.0
    %595 = vmatpush.msra.mxu0 0.0
    %596 = vmatpush.msra.mxu0 %v151
    %597 = vmatpush.msra.mxu0 %v150
    %598 = vmatpush.msra.mxu0 %v149
    %599 = vmatpush.msra.mxu0 %v148
    %600 = vmatmul.f32.gmra.mxu0 %v582
    %v601 = vpop.f32.mrf.mxu0
    %v602 = vadd.f32 0.0, %v601
    %603 = vdwg.mxu0
    %v605 = vrot.slane %v602, 4
    %v607 = vadd.f32 %v146, %v605
    %v608 = vxor.u32 %v607, 2147483648
    %v609 = vmul.f32 %v608, 1.442695
    %v610 = vpow.pop %v609
    %v611 = vadd.f32 %v610, 1.0
    %v612 = vrcp.pop %v611
    %v613 = vmul.f32 %v611, %v612
    %v614 = vsub.f32 1.0, %v613
    %v615 = vmul.f32 %v612, %v614
    %v616 = vadd.f32 %v612, %v615
    %vm617 = vweird.f32 %v611
    %vm618 = vweird.f32 %v612
    %vm619 = vmor %vm617, %vm618
    %v620 = vsel %vm619, %v612, %v616
    %v621 = vand.u32 2147483647, %v611
    %vm622 = vcmp.eq.f32.partialorder %v621, 8.507059e+37
    %v623 = vand.u32 %v611, 2147483648
    %v624 = vor.u32 1.1754944e-38, %v623
    %v625 = vsel %vm622, %v624, %v620
    %v626 = vmul.f32 1.0, %v625
    %v627 = vadd.f32 %v602, %v200
    %v629 = vrot.slane %v627, 4
    %630 = vrot.lane.b32.xlu0 %v629, 64
    %v631 = vpop.permute.xlu0 %630
    %v633 = vmul.f32 %v626, %v631
    %635 = vrot.lane.b32.xlu0 %v633, 64
    %v636 = vpop.permute.xlu0 %635
    %v638 = vadd.f32 %v146, %v636
    %v639 = vtanh.pop %v638
    %v640 = vsub.f32 1.0, %v626
    %642 = vrot.lane.b32.xlu0 %v639, 96
    %v643 = vpop.permute.xlu0 %642
    %v645 = vmul.f32 %v640, %v643
    %v646 = vrot.slane %v577, 6
    %v648 = vmul.f32 %v626, %v646
    %v649 = vadd.f32 %v645, %v648
    %v651 = vrot.slane %v649, 4
    %652 = vrot.lane.b32.xlu0 %v651, 96
    %v653 = vpop.permute.xlu0 %652
    %v654 = vsel %vm153, %v653, 0
    %656 = vmatpush.msra.mxu0 0.0
    %657 = vmatpush.msra.mxu0 0.0
    %658 = vmatpush.msra.mxu0 0.0
    %659 = vmatpush.msra.mxu0 0.0
    %660 = vmatpush.msra.mxu0 0.0
    %661 = vmatpush.msra.mxu0 0.0
    %662 = vmatpush.msra.mxu0 0.0
    %663 = vmatpush.msra.mxu0 0.0
    %664 = vmatpush.msra.mxu0 0.0
    %665 = vmatpush.msra.mxu0 0.0
    %666 = vmatpush.msra.mxu0 0.0
    %667 = vmatpush.msra.mxu0 0.0
    %668 = vmatpush.msra.mxu0 %v151
    %669 = vmatpush.msra.mxu0 %v150
    %670 = vmatpush.msra.mxu0 %v149
    %671 = vmatpush.msra.mxu0 %v148
    %672 = vmatmul.f32.gmra.mxu0 %v654
    %v673 = vpop.f32.mrf.mxu0
    %v674 = vadd.f32 0.0, %v673
    %675 = vdwg.mxu0
    %v677 = vrot.slane %v674, 2
    %v679 = vadd.f32 %v146, %v677
    %v680 = vxor.u32 %v679, 2147483648
    %v681 = vmul.f32 %v680, 1.442695
    %v682 = vpow.pop %v681
    %v683 = vadd.f32 %v682, 1.0
    %v684 = vrcp.pop %v683
    %v685 = vmul.f32 %v683, %v684
    %v686 = vsub.f32 1.0, %v685
    %v687 = vmul.f32 %v684, %v686
    %v688 = vadd.f32 %v684, %v687
    %vm689 = vweird.f32 %v683
    %vm690 = vweird.f32 %v684
    %vm691 = vmor %vm689, %vm690
    %v692 = vsel %vm691, %v684, %v688
    %v693 = vand.u32 2147483647, %v683
    %vm694 = vcmp.eq.f32.partialorder %v693, 8.507059e+37
    %v695 = vand.u32 %v683, 2147483648
    %v696 = vor.u32 1.1754944e-38, %v695
    %v697 = vsel %vm694, %v696, %v692
    %v698 = vmul.f32 1.0, %v697
    %v699 = vadd.f32 %v674, %v200
    %v701 = vrot.slane %v699, 2
    %702 = vrot.lane.b32.xlu0 %v701, 64
    %v703 = vpop.permute.xlu0 %702
    %v705 = vmul.f32 %v698, %v703
    %707 = vrot.lane.b32.xlu0 %v705, 64
    %v708 = vpop.permute.xlu0 %707
    %v710 = vadd.f32 %v146, %v708
    %v711 = vtanh.pop %v710
    %v712 = vsub.f32 1.0, %v698
    %714 = vrot.lane.b32.xlu0 %v711, 96
    %v715 = vpop.permute.xlu0 %714
    %v717 = vmul.f32 %v712, %v715
    %v718 = vrot.slane %v649, 6
    %v720 = vmul.f32 %v698, %v718
    %v721 = vadd.f32 %v717, %v720
    %vm722 = vcmask 1041408
    %v723 = vsel %vm722, %v224, %v295
    %vm724 = vcmask 1043456
    %v725 = vsel %vm724, %v723, %v367
    %vm726 = vcmask 1045504
    %v727 = vsel %vm726, %v725, %v439
    %v728 = vsel %vm722, %v506, %v577
    %v729 = vsel %vm724, %v728, %v649
    %v730 = vsel %vm726, %v729, %v721
    %v731 = vld [vmem:[#allocation7] sm:$0xff]
    %v732 = vld [vmem:[#allocation7 + $0x8] sm:$0xff]
    %v733 = vld [vmem:[#allocation7 + $0x10] sm:$0xff]
    %v734 = vld [vmem:[#allocation7 + $0x18] sm:$0xff]
    %v735 = vld [vmem:[%s8] sm:$0x1]
    %v737 = vperm.slane %v735, 0
    %741 = vrot.lane.b32.xlu0 %v727, 96
    %v742 = vpop.permute.xlu0 %741
    %743 = vrot.lane.b32.xlu0 %v730, 96
    %v744 = vpop.permute.xlu0 %743
    %v745 = vsel %vm153, %v742, 0
    %v747 = vsel %vm153, %v744, 0
    %749 = vmatpush.msra.mxu0 0.0
    %750 = vmatpush.msra.mxu0 0.0
    %751 = vmatpush.msra.mxu0 0.0
    %752 = vmatpush.msra.mxu0 0.0
    %753 = vmatpush.msra.mxu0 0.0
    %754 = vmatpush.msra.mxu0 0.0
    %755 = vmatpush.msra.mxu0 0.0
    %756 = vmatpush.msra.mxu0 0.0
    %757 = vmatpush.msra.mxu0 0.0
    %758 = vmatpush.msra.mxu0 0.0
    %759 = vmatpush.msra.mxu0 0.0
    %760 = vmatpush.msra.mxu0 0.0
    %761 = vmatpush.msra.mxu0 %v734
    %762 = vmatpush.msra.mxu0 %v733
    %763 = vmatpush.msra.mxu0 %v732
    %764 = vmatpush.msra.mxu0 %v731
    %765 = vmatmul.f32.gmra.mxu0 %v745
    %v766 = vpop.f32.mrf.mxu0
    %v767 = vadd.f32 %v737, %v766
    %768 = vmatmul.f32.gmra.mxu0 %v747
    %v769 = vpop.f32.mrf.mxu0
    %v770 = vadd.f32 %v737, %v769
    %771 = vdwg.mxu0
    %v772 = vld [vmem:[#allocation8] sm:$0xff]
    %v773 = vld [vmem:[#allocation8 + $0x8] sm:$0xff]
    %v774 = vld [vmem:[#allocation8 + $0x10] sm:$0xff]
    %v775 = vld [vmem:[#allocation8 + $0x18] sm:$0xff]
    %v776 = vld [vmem:[%s9] sm:$0x1]
    %v778 = vsel %vm153, %v111, 0
    %780 = vmatpush.msra.mxu0 0.0
    %781 = vmatpush.msra.mxu0 0.0
    %782 = vmatpush.msra.mxu0 0.0
    %783 = vmatpush.msra.mxu0 0.0
    %784 = vmatpush.msra.mxu0 0.0
    %785 = vmatpush.msra.mxu0 0.0
    %786 = vmatpush.msra.mxu0 0.0
    %787 = vmatpush.msra.mxu0 0.0
    %788 = vmatpush.msra.mxu0 0.0
    %789 = vmatpush.msra.mxu0 0.0
    %790 = vmatpush.msra.mxu0 0.0
    %791 = vmatpush.msra.mxu0 0.0
    %792 = vmatpush.msra.mxu0 %v775
    %793 = vmatpush.msra.mxu0 %v774
    %794 = vmatpush.msra.mxu0 %v773
    %795 = vmatpush.msra.mxu0 %v772
    %796 = vmatmul.f32.gmra.mxu0 %v778
    %v797 = vpop.f32.mrf.mxu0
    %v798 = vadd.f32 0.0, %v797
    %799 = vdwg.mxu0
    %v800 = vadd.f32 %v767, %v798
    %v801 = vxor.u32 %v800, 2147483648
    %v802 = vmul.f32 %v801, 1.442695
    %v803 = vpow.pop %v802
    %v804 = vadd.f32 %v803, 1.0
    %v805 = vrcp.pop %v804
    %v806 = vmul.f32 %v804, %v805
    %v807 = vsub.f32 1.0, %v806
    %v808 = vmul.f32 %v805, %v807
    %v809 = vadd.f32 %v805, %v808
    %vm810 = vweird.f32 %v804
    %vm811 = vweird.f32 %v805
    %vm812 = vmor %vm810, %vm811
    %v813 = vsel %vm812, %v805, %v809
    %v814 = vand.u32 2147483647, %v804
    %vm815 = vcmp.eq.f32.partialorder %v814, 8.507059e+37
    %v816 = vand.u32 %v804, 2147483648
    %v817 = vor.u32 1.1754944e-38, %v816
    %v818 = vsel %vm815, %v817, %v813
    %v819 = vmul.f32 1.0, %v818
    %v821 = vperm.slane %v776, 0
    %822 = vrot.lane.b32.xlu0 %v821, 64
    %v823 = vpop.permute.xlu0 %822
    %v825 = vadd.f32 %v798, %v823
    %827 = vrot.lane.b32.xlu0 %v825, 64
    %v828 = vpop.permute.xlu0 %827
    %v830 = vmul.f32 %v819, %v828
    %832 = vrot.lane.b32.xlu0 %v830, 64
    %v833 = vpop.permute.xlu0 %832
    %v835 = vadd.f32 %v767, %v833
    %v836 = vtanh.pop %v835
    %v837 = vsub.f32 1.0, %v819
    %839 = vrot.lane.b32.xlu0 %v836, 96
    %v840 = vpop.permute.xlu0 %839
    %v842 = vmul.f32 %v837, %v840
    %843 = vrot.lane.b32.xlu0 %v111, 32
    %v844 = vpop.permute.xlu0 %843
    %v846 = vmul.f32 %v819, %v844
    %v847 = vadd.f32 %v842, %v846
    %849 = vrot.lane.b32.xlu0 %v847, 96
    %v850 = vpop.permute.xlu0 %849
    %v851 = vsel %vm153, %v850, 0
    %853 = vmatpush.msra.mxu0 0.0
    %854 = vmatpush.msra.mxu0 0.0
    %855 = vmatpush.msra.mxu0 0.0
    %856 = vmatpush.msra.mxu0 0.0
    %857 = vmatpush.msra.mxu0 0.0
    %858 = vmatpush.msra.mxu0 0.0
    %859 = vmatpush.msra.mxu0 0.0
    %860 = vmatpush.msra.mxu0 0.0
    %861 = vmatpush.msra.mxu0 0.0
    %862 = vmatpush.msra.mxu0 0.0
    %863 = vmatpush.msra.mxu0 0.0
    %864 = vmatpush.msra.mxu0 0.0
    %865 = vmatpush.msra.mxu0 %v775
    %866 = vmatpush.msra.mxu0 %v774
    %867 = vmatpush.msra.mxu0 %v773
    %868 = vmatpush.msra.mxu0 %v772
    %869 = vmatmul.f32.gmra.mxu0 %v851
    %v870 = vpop.f32.mrf.mxu0
    %v871 = vadd.f32 0.0, %v870
    %872 = vdwg.mxu0
    %v874 = vrot.slane %v871, 6
    %v876 = vadd.f32 %v767, %v874
    %v877 = vxor.u32 %v876, 2147483648
    %v878 = vmul.f32 %v877, 1.442695
    %v879 = vpow.pop %v878
    %v880 = vadd.f32 %v879, 1.0
    %v881 = vrcp.pop %v880
    %v882 = vmul.f32 %v880, %v881
    %v883 = vsub.f32 1.0, %v882
    %v884 = vmul.f32 %v881, %v883
    %v885 = vadd.f32 %v881, %v884
    %vm886 = vweird.f32 %v880
    %vm887 = vweird.f32 %v881
    %vm888 = vmor %vm886, %vm887
    %v889 = vsel %vm888, %v881, %v885
    %v890 = vand.u32 2147483647, %v880
    %vm891 = vcmp.eq.f32.partialorder %v890, 8.507059e+37
    %v892 = vand.u32 %v880, 2147483648
    %v893 = vor.u32 1.1754944e-38, %v892
    %v894 = vsel %vm891, %v893, %v889
    %v895 = vmul.f32 1.0, %v894
    %v896 = vadd.f32 %v871, %v823
    %v898 = vrot.slane %v896, 6
    %899 = vrot.lane.b32.xlu0 %v898, 64
    %v900 = vpop.permute.xlu0 %899
    %v902 = vmul.f32 %v895, %v900
    %904 = vrot.lane.b32.xlu0 %v902, 64
    %v905 = vpop.permute.xlu0 %904
    %v907 = vadd.f32 %v767, %v905
    %v908 = vtanh.pop %v907
    %v909 = vsub.f32 1.0, %v895
    %911 = vrot.lane.b32.xlu0 %v908, 96
    %v912 = vpop.permute.xlu0 %911
    %v914 = vmul.f32 %v909, %v912
    %v915 = vrot.slane %v847, 6
    %v917 = vmul.f32 %v895, %v915
    %v918 = vadd.f32 %v914, %v917
    %v920 = vrot.slane %v918, 2
    %921 = vrot.lane.b32.xlu0 %v920, 96
    %v922 = vpop.permute.xlu0 %921
    %v923 = vsel %vm153, %v922, 0
    %925 = vmatpush.msra.mxu0 0.0
    %926 = vmatpush.msra.mxu0 0.0
    %927 = vmatpush.msra.mxu0 0.0
    %928 = vmatpush.msra.mxu0 0.0
    %929 = vmatpush.msra.mxu0 0.0
    %930 = vmatpush.msra.mxu0 0.0
    %931 = vmatpush.msra.mxu0 0.0
    %932 = vmatpush.msra.mxu0 0.0
    %933 = vmatpush.msra.mxu0 0.0
    %934 = vmatpush.msra.mxu0 0.0
    %935 = vmatpush.msra.mxu0 0.0
    %936 = vmatpush.msra.mxu0 0.0
    %937 = vmatpush.msra.mxu0 %v775
    %938 = vmatpush.msra.mxu0 %v774
    %939 = vmatpush.msra.mxu0 %v773
    %940 = vmatpush.msra.mxu0 %v772
    %941 = vmatmul.f32.gmra.mxu0 %v923
    %v942 = vpop.f32.mrf.mxu0
    %v943 = vadd.f32 0.0, %v942
    %944 = vdwg.mxu0
    %v946 = vrot.slane %v943, 4
    %v948 = vadd.f32 %v767, %v946
    %v949 = vxor.u32 %v948, 2147483648
    %v950 = vmul.f32 %v949, 1.442695
    %v951 = vpow.pop %v950
    %v952 = vadd.f32 %v951, 1.0
    %v953 = vrcp.pop %v952
    %v954 = vmul.f32 %v952, %v953
    %v955 = vsub.f32 1.0, %v954
    %v956 = vmul.f32 %v953, %v955
    %v957 = vadd.f32 %v953, %v956
    %vm958 = vweird.f32 %v952
    %vm959 = vweird.f32 %v953
    %vm960 = vmor %vm958, %vm959
    %v961 = vsel %vm960, %v953, %v957
    %v962 = vand.u32 2147483647, %v952
    %vm963 = vcmp.eq.f32.partialorder %v962, 8.507059e+37
    %v964 = vand.u32 %v952, 2147483648
    %v965 = vor.u32 1.1754944e-38, %v964
    %v966 = vsel %vm963, %v965, %v961
    %v967 = vmul.f32 1.0, %v966
    %v968 = vadd.f32 %v943, %v823
    %v970 = vrot.slane %v968, 4
    %971 = vrot.lane.b32.xlu0 %v970, 64
    %v972 = vpop.permute.xlu0 %971
    %v974 = vmul.f32 %v967, %v972
    %976 = vrot.lane.b32.xlu0 %v974, 64
    %v977 = vpop.permute.xlu0 %976
    %v979 = vadd.f32 %v767, %v977
    %v980 = vtanh.pop %v979
    %v981 = vsub.f32 1.0, %v967
    %983 = vrot.lane.b32.xlu0 %v980, 96
    %v984 = vpop.permute.xlu0 %983
    %v986 = vmul.f32 %v981, %v984
    %v987 = vrot.slane %v918, 6
    %v989 = vmul.f32 %v967, %v987
    %v990 = vadd.f32 %v986, %v989
    %v992 = vrot.slane %v990, 4
    %993 = vrot.lane.b32.xlu0 %v992, 96
    %v994 = vpop.permute.xlu0 %993
    %v995 = vsel %vm153, %v994, 0
    %997 = vmatpush.msra.mxu0 0.0
    %998 = vmatpush.msra.mxu0 0.0
    %999 = vmatpush.msra.mxu0 0.0
    %1000 = vmatpush.msra.mxu0 0.0
    %1001 = vmatpush.msra.mxu0 0.0
    %1002 = vmatpush.msra.mxu0 0.0
    %1003 = vmatpush.msra.mxu0 0.0
    %1004 = vmatpush.msra.mxu0 0.0
    %1005 = vmatpush.msra.mxu0 0.0
    %1006 = vmatpush.msra.mxu0 0.0
    %1007 = vmatpush.msra.mxu0 0.0
    %1008 = vmatpush.msra.mxu0 0.0
    %1009 = vmatpush.msra.mxu0 %v775
    %1010 = vmatpush.msra.mxu0 %v774
    %1011 = vmatpush.msra.mxu0 %v773
    %1012 = vmatpush.msra.mxu0 %v772
    %1013 = vmatmul.f32.gmra.mxu0 %v995
    %v1014 = vpop.f32.mrf.mxu0
    %v1015 = vadd.f32 0.0, %v1014
    %1016 = vdwg.mxu0
    %v1018 = vrot.slane %v1015, 2
    %v1020 = vadd.f32 %v767, %v1018
    %v1021 = vxor.u32 %v1020, 2147483648
    %v1022 = vmul.f32 %v1021, 1.442695
    %v1023 = vpow.pop %v1022
    %v1024 = vadd.f32 %v1023, 1.0
    %v1025 = vrcp.pop %v1024
    %v1026 = vmul.f32 %v1024, %v1025
    %v1027 = vsub.f32 1.0, %v1026
    %v1028 = vmul.f32 %v1025, %v1027
    %v1029 = vadd.f32 %v1025, %v1028
    %vm1030 = vweird.f32 %v1024
    %vm1031 = vweird.f32 %v1025
    %vm1032 = vmor %vm1030, %vm1031
    %v1033 = vsel %vm1032, %v1025, %v1029
    %v1034 = vand.u32 2147483647, %v1024
    %vm1035 = vcmp.eq.f32.partialorder %v1034, 8.507059e+37
    %v1036 = vand.u32 %v1024, 2147483648
    %v1037 = vor.u32 1.1754944e-38, %v1036
    %v1038 = vsel %vm1035, %v1037, %v1033
    %v1039 = vmul.f32 1.0, %v1038
    %v1040 = vadd.f32 %v1015, %v823
    %v1042 = vrot.slane %v1040, 2
    %1043 = vrot.lane.b32.xlu0 %v1042, 64
    %v1044 = vpop.permute.xlu0 %1043
    %v1046 = vmul.f32 %v1039, %v1044
    %1048 = vrot.lane.b32.xlu0 %v1046, 64
    %v1049 = vpop.permute.xlu0 %1048
    %v1051 = vadd.f32 %v767, %v1049
    %v1052 = vtanh.pop %v1051
    %v1053 = vsub.f32 1.0, %v1039
    %1055 = vrot.lane.b32.xlu0 %v1052, 96
    %v1056 = vpop.permute.xlu0 %1055
    %v1058 = vmul.f32 %v1053, %v1056
    %v1059 = vrot.slane %v990, 6
    %v1061 = vmul.f32 %v1039, %v1059
    %v1062 = vadd.f32 %v1058, %v1061
    %v1064 = vrot.slane %v1062, 6
    %1065 = vrot.lane.b32.xlu0 %v1064, 96
    %v1066 = vpop.permute.xlu0 %1065
    %v1067 = vsel %vm153, %v1066, 0
    %1069 = vmatpush.msra.mxu0 0.0
    %1070 = vmatpush.msra.mxu0 0.0
    %1071 = vmatpush.msra.mxu0 0.0
    %1072 = vmatpush.msra.mxu0 0.0
    %1073 = vmatpush.msra.mxu0 0.0
    %1074 = vmatpush.msra.mxu0 0.0
    %1075 = vmatpush.msra.mxu0 0.0
    %1076 = vmatpush.msra.mxu0 0.0
    %1077 = vmatpush.msra.mxu0 0.0
    %1078 = vmatpush.msra.mxu0 0.0
    %1079 = vmatpush.msra.mxu0 0.0
    %1080 = vmatpush.msra.mxu0 0.0
    %1081 = vmatpush.msra.mxu0 %v775
    %1082 = vmatpush.msra.mxu0 %v774
    %1083 = vmatpush.msra.mxu0 %v773
    %1084 = vmatpush.msra.mxu0 %v772
    %1085 = vmatmul.f32.gmra.mxu0 %v1067
    %v1086 = vpop.f32.mrf.mxu0
    %v1087 = vadd.f32 0.0, %v1086
    %1088 = vdwg.mxu0
    %v1089 = vadd.f32 %v770, %v1087
    %v1090 = vxor.u32 %v1089, 2147483648
    %v1091 = vmul.f32 %v1090, 1.442695
    %v1092 = vpow.pop %v1091
    %v1093 = vadd.f32 %v1092, 1.0
    %v1094 = vrcp.pop %v1093
    %v1095 = vmul.f32 %v1093, %v1094
    %v1096 = vsub.f32 1.0, %v1095
    %v1097 = vmul.f32 %v1094, %v1096
    %v1098 = vadd.f32 %v1094, %v1097
    %vm1099 = vweird.f32 %v1093
    %vm1100 = vweird.f32 %v1094
    %vm1101 = vmor %vm1099, %vm1100
    %v1102 = vsel %vm1101, %v1094, %v1098
    %v1103 = vand.u32 2147483647, %v1093
    %vm1104 = vcmp.eq.f32.partialorder %v1103, 8.507059e+37
    %v1105 = vand.u32 %v1093, 2147483648
    %v1106 = vor.u32 1.1754944e-38, %v1105
    %v1107 = vsel %vm1104, %v1106, %v1102
    %v1108 = vmul.f32 1.0, %v1107
    %v1109 = vadd.f32 %v1087, %v823
    %1111 = vrot.lane.b32.xlu0 %v1109, 64
    %v1112 = vpop.permute.xlu0 %1111
    %v1114 = vmul.f32 %v1108, %v1112
    %1116 = vrot.lane.b32.xlu0 %v1114, 64
    %v1117 = vpop.permute.xlu0 %1116
    %v1119 = vadd.f32 %v770, %v1117
    %v1120 = vtanh.pop %v1119
    %v1121 = vsub.f32 1.0, %v1108
    %1123 = vrot.lane.b32.xlu0 %v1120, 96
    %v1124 = vpop.permute.xlu0 %1123
    %v1126 = vmul.f32 %v1121, %v1124
    %v1128 = vmul.f32 %v1108, %v1064
    %v1129 = vadd.f32 %v1126, %v1128
    %1131 = vrot.lane.b32.xlu0 %v1129, 96
    %v1132 = vpop.permute.xlu0 %1131
    %v1133 = vsel %vm153, %v1132, 0
    %1135 = vmatpush.msra.mxu0 0.0
    %1136 = vmatpush.msra.mxu0 0.0
    %1137 = vmatpush.msra.mxu0 0.0
    %1138 = vmatpush.msra.mxu0 0.0
    %1139 = vmatpush.msra.mxu0 0.0
    %1140 = vmatpush.msra.mxu0 0.0
    %1141 = vmatpush.msra.mxu0 0.0
    %1142 = vmatpush.msra.mxu0 0.0
    %1143 = vmatpush.msra.mxu0 0.0
    %1144 = vmatpush.msra.mxu0 0.0
    %1145 = vmatpush.msra.mxu0 0.0
    %1146 = vmatpush.msra.mxu0 0.0
    %1147 = vmatpush.msra.mxu0 %v775
    %1148 = vmatpush.msra.mxu0 %v774
    %1149 = vmatpush.msra.mxu0 %v773
    %1150 = vmatpush.msra.mxu0 %v772
    %1151 = vmatmul.f32.gmra.mxu0 %v1133
    %v1152 = vpop.f32.mrf.mxu0
    %v1153 = vadd.f32 0.0, %v1152
    %1154 = vdwg.mxu0
    %v1156 = vrot.slane %v1153, 6
    %v1158 = vadd.f32 %v770, %v1156
    %v1159 = vxor.u32 %v1158, 2147483648
    %v1160 = vmul.f32 %v1159, 1.442695
    %v1161 = vpow.pop %v1160
    %v1162 = vadd.f32 %v1161, 1.0
    %v1163 = vrcp.pop %v1162
    %v1164 = vmul.f32 %v1162, %v1163
    %v1165 = vsub.f32 1.0, %v1164
    %v1166 = vmul.f32 %v1163, %v1165
    %v1167 = vadd.f32 %v1163, %v1166
    %vm1168 = vweird.f32 %v1162
    %vm1169 = vweird.f32 %v1163
    %vm1170 = vmor %vm1168, %vm1169
    %v1171 = vsel %vm1170, %v1163, %v1167
    %v1172 = vand.u32 2147483647, %v1162
    %vm1173 = vcmp.eq.f32.partialorder %v1172, 8.507059e+37
    %v1174 = vand.u32 %v1162, 2147483648
    %v1175 = vor.u32 1.1754944e-38, %v1174
    %v1176 = vsel %vm1173, %v1175, %v1171
    %v1177 = vmul.f32 1.0, %v1176
    %v1178 = vadd.f32 %v1153, %v823
    %v1180 = vrot.slane %v1178, 6
    %1181 = vrot.lane.b32.xlu0 %v1180, 64
    %v1182 = vpop.permute.xlu0 %1181
    %v1184 = vmul.f32 %v1177, %v1182
    %1186 = vrot.lane.b32.xlu0 %v1184, 64
    %v1187 = vpop.permute.xlu0 %1186
    %v1189 = vadd.f32 %v770, %v1187
    %v1190 = vtanh.pop %v1189
    %v1191 = vsub.f32 1.0, %v1177
    %1193 = vrot.lane.b32.xlu0 %v1190, 96
    %v1194 = vpop.permute.xlu0 %1193
    %v1196 = vmul.f32 %v1191, %v1194
    %v1197 = vrot.slane %v1129, 6
    %v1199 = vmul.f32 %v1177, %v1197
    %v1200 = vadd.f32 %v1196, %v1199
    %v1202 = vrot.slane %v1200, 2
    %1203 = vrot.lane.b32.xlu0 %v1202, 96
    %v1204 = vpop.permute.xlu0 %1203
    %v1205 = vsel %vm153, %v1204, 0
    %1207 = vmatpush.msra.mxu0 0.0
    %1208 = vmatpush.msra.mxu0 0.0
    %1209 = vmatpush.msra.mxu0 0.0
    %1210 = vmatpush.msra.mxu0 0.0
    %1211 = vmatpush.msra.mxu0 0.0
    %1212 = vmatpush.msra.mxu0 0.0
    %1213 = vmatpush.msra.mxu0 0.0
    %1214 = vmatpush.msra.mxu0 0.0
    %1215 = vmatpush.msra.mxu0 0.0
    %1216 = vmatpush.msra.mxu0 0.0
    %1217 = vmatpush.msra.mxu0 0.0
    %1218 = vmatpush.msra.mxu0 0.0
    %1219 = vmatpush.msra.mxu0 %v775
    %1220 = vmatpush.msra.mxu0 %v774
    %1221 = vmatpush.msra.mxu0 %v773
    %1222 = vmatpush.msra.mxu0 %v772
    %1223 = vmatmul.f32.gmra.mxu0 %v1205
    %v1224 = vpop.f32.mrf.mxu0
    %v1225 = vadd.f32 0.0, %v1224
    %1226 = vdwg.mxu0
    %v1228 = vrot.slane %v1225, 4
    %v1230 = vadd.f32 %v770, %v1228
    %v1231 = vxor.u32 %v1230, 2147483648
    %v1232 = vmul.f32 %v1231, 1.442695
    %v1233 = vpow.pop %v1232
    %v1234 = vadd.f32 %v1233, 1.0
    %v1235 = vrcp.pop %v1234
    %v1236 = vmul.f32 %v1234, %v1235
    %v1237 = vsub.f32 1.0, %v1236
    %v1238 = vmul.f32 %v1235, %v1237
    %v1239 = vadd.f32 %v1235, %v1238
    %vm1240 = vweird.f32 %v1234
    %vm1241 = vweird.f32 %v1235
    %vm1242 = vmor %vm1240, %vm1241
    %v1243 = vsel %vm1242, %v1235, %v1239
    %v1244 = vand.u32 2147483647, %v1234
    %vm1245 = vcmp.eq.f32.partialorder %v1244, 8.507059e+37
    %v1246 = vand.u32 %v1234, 2147483648
    %v1247 = vor.u32 1.1754944e-38, %v1246
    %v1248 = vsel %vm1245, %v1247, %v1243
    %v1249 = vmul.f32 1.0, %v1248
    %v1250 = vadd.f32 %v1225, %v823
    %v1252 = vrot.slane %v1250, 4
    %1253 = vrot.lane.b32.xlu0 %v1252, 64
    %v1254 = vpop.permute.xlu0 %1253
    %v1256 = vmul.f32 %v1249, %v1254
    %1258 = vrot.lane.b32.xlu0 %v1256, 64
    %v1259 = vpop.permute.xlu0 %1258
    %v1261 = vadd.f32 %v770, %v1259
    %v1262 = vtanh.pop %v1261
    %v1263 = vsub.f32 1.0, %v1249
    %1265 = vrot.lane.b32.xlu0 %v1262, 96
    %v1266 = vpop.permute.xlu0 %1265
    %v1268 = vmul.f32 %v1263, %v1266
    %v1269 = vrot.slane %v1200, 6
    %v1271 = vmul.f32 %v1249, %v1269
    %v1272 = vadd.f32 %v1268, %v1271
    %v1274 = vrot.slane %v1272, 4
    %1275 = vrot.lane.b32.xlu0 %v1274, 96
    %v1276 = vpop.permute.xlu0 %1275
    %v1277 = vsel %vm153, %v1276, 0
    %1279 = vmatpush.msra.mxu0 0.0
    %1280 = vmatpush.msra.mxu0 0.0
    %1281 = vmatpush.msra.mxu0 0.0
    %1282 = vmatpush.msra.mxu0 0.0
    %1283 = vmatpush.msra.mxu0 0.0
    %1284 = vmatpush.msra.mxu0 0.0
    %1285 = vmatpush.msra.mxu0 0.0
    %1286 = vmatpush.msra.mxu0 0.0
    %1287 = vmatpush.msra.mxu0 0.0
    %1288 = vmatpush.msra.mxu0 0.0
    %1289 = vmatpush.msra.mxu0 0.0
    %1290 = vmatpush.msra.mxu0 0.0
    %1291 = vmatpush.msra.mxu0 %v775
    %1292 = vmatpush.msra.mxu0 %v774
    %1293 = vmatpush.msra.mxu0 %v773
    %1294 = vmatpush.msra.mxu0 %v772
    %1295 = vmatmul.f32.gmra.mxu0 %v1277
    %v1296 = vpop.f32.mrf.mxu0
    %v1297 = vadd.f32 0.0, %v1296
    %1298 = vdwg.mxu0
    %v1300 = vrot.slane %v1297, 2
    %v1302 = vadd.f32 %v770, %v1300
    %v1303 = vxor.u32 %v1302, 2147483648
    %v1304 = vmul.f32 %v1303, 1.442695
    %v1305 = vpow.pop %v1304
    %v1306 = vadd.f32 %v1305, 1.0
    %v1307 = vrcp.pop %v1306
    %v1308 = vmul.f32 %v1306, %v1307
    %v1309 = vsub.f32 1.0, %v1308
    %v1310 = vmul.f32 %v1307, %v1309
    %v1311 = vadd.f32 %v1307, %v1310
    %vm1312 = vweird.f32 %v1306
    %vm1313 = vweird.f32 %v1307
    %vm1314 = vmor %vm1312, %vm1313
    %v1315 = vsel %vm1314, %v1307, %v1311
    %v1316 = vand.u32 2147483647, %v1306
    %vm1317 = vcmp.eq.f32.partialorder %v1316, 8.507059e+37
    %v1318 = vand.u32 %v1306, 2147483648
    %v1319 = vor.u32 1.1754944e-38, %v1318
    %v1320 = vsel %vm1317, %v1319, %v1315
    %v1321 = vmul.f32 1.0, %v1320
    %v1322 = vadd.f32 %v1297, %v823
    %v1324 = vrot.slane %v1322, 2
    %1325 = vrot.lane.b32.xlu0 %v1324, 64
    %v1326 = vpop.permute.xlu0 %1325
    %v1328 = vmul.f32 %v1321, %v1326
    %1330 = vrot.lane.b32.xlu0 %v1328, 64
    %v1331 = vpop.permute.xlu0 %1330
    %v1333 = vadd.f32 %v770, %v1331
    %v1334 = vtanh.pop %v1333
    %v1335 = vsub.f32 1.0, %v1321
    %1337 = vrot.lane.b32.xlu0 %v1334, 96
    %v1338 = vpop.permute.xlu0 %1337
    %v1340 = vmul.f32 %v1335, %v1338
    %v1341 = vrot.slane %v1272, 6
    %v1343 = vmul.f32 %v1321, %v1341
    %v1344 = vadd.f32 %v1340, %v1343
    %v1345 = vsel %vm722, %v847, %v918
    %v1346 = vsel %vm724, %v1345, %v990
    %v1347 = vsel %vm726, %v1346, %v1062
    %v1348 = vsel %vm722, %v1129, %v1200
    %v1349 = vsel %vm724, %v1348, %v1272
    %v1350 = vsel %vm726, %v1349, %v1344
    %1352 = vrot.lane.b32.xlu0 %v721, 96
    %v1353 = vpop.permute.xlu0 %1352
    %vm1355 = vcmask 261126
    %1356 = vst.msk [vmem:[#allocation11 - $0x6] sm:$0xc0] %vm1355, %v1353
    %1358 = vrot.lane.b32.xlu0 %v1344, 96
    %v1359 = vpop.permute.xlu0 %1358
    %s1361 = scalar_lea.vmem [#allocation11], 2
    %1362 = vst.msk [vmem:[%s1361 - $0x6] sm:$0xc0] %vm1355, %v1359
    %v1363 = vmax.f32 %v1347, 0.0
    %v1364 = vmax.f32 %v1350, 0.0
    %v1365 = vld [vmem:[%s10] sm:$0xff]
    %v1366 = vld [vmem:[%s10 + $0x8] sm:$0xff]
    %v1367 = vld [vmem:[%s10 + $0x10] sm:$0xff]
    %v1368 = vld [vmem:[%s10 + $0x18] sm:$0xff]
    %v1369 = vld [vmem:[%s11] sm:$0x1]
    %v1371 = vperm.slane %v1369, 0
    %1375 = vrot.lane.b32.xlu0 %v1363, 96
    %v1376 = vpop.permute.xlu0 %1375
    %1377 = vrot.lane.b32.xlu0 %v1364, 96
    %v1378 = vpop.permute.xlu0 %1377
    %v1379 = vsel %vm153, %v1376, 0
    %v1381 = vsel %vm153, %v1378, 0
    %1383 = vmatpush.msra.mxu0 0.0
    %1384 = vmatpush.msra.mxu0 0.0
    %1385 = vmatpush.msra.mxu0 0.0
    %1386 = vmatpush.msra.mxu0 0.0
    %1387 = vmatpush.msra.mxu0 0.0
    %1388 = vmatpush.msra.mxu0 0.0
    %1389 = vmatpush.msra.mxu0 0.0
    %1390 = vmatpush.msra.mxu0 0.0
    %1391 = vmatpush.msra.mxu0 0.0
    %1392 = vmatpush.msra.mxu0 0.0
    %1393 = vmatpush.msra.mxu0 0.0
    %1394 = vmatpush.msra.mxu0 0.0
    %1395 = vmatpush.msra.mxu0 %v1368
    %1396 = vmatpush.msra.mxu0 %v1367
    %1397 = vmatpush.msra.mxu0 %v1366
    %1398 = vmatpush.msra.mxu0 %v1365
    %1399 = vmatmul.f32.gmra.mxu0 %v1379
    %v1400 = vpop.f32.mrf.mxu0
    %v1401 = vadd.f32 %v1371, %v1400
    %1402 = vmatmul.f32.gmra.mxu0 %v1381
    %v1403 = vpop.f32.mrf.mxu0
    %v1404 = vadd.f32 %v1371, %v1403
    %1405 = vdwg.mxu0
    %vm1406 = vcmask 80896
    %1407 = vst.msk [vmem:[#allocation10] sm:$0xff] %vm1406, %v1401
    %1408 = vst.msk [vmem:[#allocation10 + $0x8] sm:$0xff] %vm1406, %v1404
    // Predicated region
    $region66: #{tpu_custom_call.1} parent=1 // pred_check
      _
    $region67: #{tpu_custom_call.1} parent=1 // pred_check_branch
      %1410 = sbr.rel (0) target = $region69
    $region68: #{tpu_custom_call.1} parent=1 // pred_region
      %1412 = vsyncadd [#allocation4], 0
      %s1413 = sshll.u32 [#allocation10], 4
      %s1414 = int_to_ptr.vmem [resolvable:$true] %s1413
      %s1415 = sshll.u32 %s12, 4
      %s1416 = int_to_ptr.hbm [resolvable:$true] %s1415
      %1421 = dma.vmem_to_hbm [thread:$0]  %s1414, 256, %s1416, [#allocation4], 128, 128, 8
    $region69: #{tpu_custom_call.1} parent=1 // pred_fallthru
      _
    // Predicated region
    $region70: #{tpu_custom_call.1} parent=1 // pred_check
      _
    $region71: #{tpu_custom_call.1} parent=1 // pred_check_branch
      %1423 = sbr.rel (0) target = $region73
    $region72: #{tpu_custom_call.1} parent=1 // pred_region
      %1425 = vsyncadd [#allocation12], 0
      %s1426 = sshll.u32 [#allocation11], 4
      %s1427 = int_to_ptr.vmem [resolvable:$true] %s1426
      %s1428 = sshll.u32 %s13, 4
      %s1429 = int_to_ptr.hbm [resolvable:$true] %s1428
      %1434 = dma.vmem_to_hbm [thread:$0]  %s1427, 64, %s1429, [#allocation12], 32, 32, 2
    $region73: #{tpu_custom_call.1} parent=1 // pred_fallthru
      _
    // Predicated region
    $region74: #{tpu_custom_call.1} parent=1 // pred_check
      _
    $region75: #{tpu_custom_call.1} parent=1 // pred_check_branch
      %1436 = sbr.rel (0) target = $region77
    $region76: #{tpu_custom_call.1} parent=1 // pred_region
      %1438 = dma.done [#allocation4], 256
    $region77: #{tpu_custom_call.1} parent=1 // pred_fallthru
      _
    // Predicated region
    $region78: #{tpu_custom_call.1} parent=1 // pred_check
      _
    $region79: #{tpu_custom_call.1} parent=1 // pred_check_branch
      %1440 = sbr.rel (0) target = $region81
    $region80: #{tpu_custom_call.1} parent=1 // pred_region
      %1442 = dma.done [#allocation12], 64
    $region81: #{tpu_custom_call.1} parent=1 // pred_fallthru
      _
    %1443 = vsyncpa [#allocation3], 1
    %1444 = vsyncpa [#allocation6], 1
    %1445 = vsyncpa [#allocation9], 1
    %1446 = vsyncpa [#allocation4], 1
    %1447 = vsyncpa [#allocation12], 1

</llo_original>
